<compile_context>
chip_gen: v7x
topology: tpu7x:2x2x1
jax: 0.10.0
libtpu: 0.0.40
codegen_flags: <defaults>
</compile_context>

<pallas_src>
import functools

import jax
import jax.numpy as jnp
from jax import lax
from jax.experimental import pallas as pl
from jax.experimental.pallas import tpu as pltpu

_EPS = 1e-5
_PADR = 8        # zero margin rows above/below each image's flat padded grid
_LANES = 128


def _tap_windows(buf, core0, core, wp):
    """All nine 3x3 taps as contiguous row windows of one flat (rows, C) buffer."""
    cols = []
    for dh in range(3):
        for dw in range(3):
            s = core0 + (dh - 1) * wp + (dw - 1)     # static offset, in bounds
            cols.append(buf[s:s + core, :])
    return jnp.concatenate(cols, axis=1)             # (core, 9*C)


def _conv1_kernel(H, W, mxu_dtype, x_ref, w1_ref, mcore_ref, y1_ref, st_ref):
    """Pass 1: conv1 (single im2col MXU matmul) + per-image BN1 partial sums."""
    wp = W + 2
    core = H * wp
    core0 = _PADR + wp
    cmid = w1_ref.shape[1]
    r_img = x_ref.shape[1]

    xb = x_ref[0].astype(mxu_dtype)                              # (r_img, Cin)
    acc = jnp.dot(_tap_windows(xb, core0, core, wp), w1_ref[...],
                  preferred_element_type=jnp.float32)            # (core, Cmid) f32
    acc = acc * mcore_ref[...]                 # zero the W-halo (garbage) columns

    s = jnp.sum(acc, axis=0, keepdims=True)
    ss = jnp.sum(acc * acc, axis=0, keepdims=True)
    st_ref[0] = jnp.concatenate([s, ss], axis=0)                 # (2, Cmid)

    # Store conv1 raw output back in the SAME flat padded layout; margin and
    # H-halo rows are written as zeros (they are exactly conv2's zero padding).
    y1_ref[0, :core0, :] = jnp.zeros((core0, cmid), jnp.float32)
    y1_ref[0, core0:core0 + core, :] = acc
    y1_ref[0, core0 + core:, :] = jnp.zeros(
        (r_img - core0 - core, cmid), jnp.float32)


def _conv2_kernel(H, W, mxu_dtype, y1_ref, sc1_ref, sh1_ref, w2_ref,
                  mfull_ref, mcore_ref, y2_ref, st_ref):
    """Pass 2: folded bn1 + relu, conv2 matmul, per-image BN2 partial sums."""
    wp = W + 2
    core = H * wp
    core0 = _PADR + wp

    # bn1 + relu over the whole flat buffer, then re-zero halo/margin rows
    # (the BN shift would otherwise turn the zero padding into relu(shift)).
    a = jnp.maximum(y1_ref[0] * sc1_ref[...] + sh1_ref[...], 0.0) * mfull_ref[...]
    ab = a.astype(mxu_dtype)

    acc = jnp.dot(_tap_windows(ab, core0, core, wp), w2_ref[...],
                  preferred_element_type=jnp.float32)            # (core, Cpad)
    acc = acc * mcore_ref[...]

    s = jnp.sum(acc, axis=0, keepdims=True)
    ss = jnp.sum(acc * acc, axis=0, keepdims=True)
    st_ref[0] = jnp.concatenate([s, ss], axis=0)
    y2_ref[0] = acc


def _bn2_res_kernel(H, W, use_1x1conv, mxu_dtype, y2_ref, sc2_ref, sh2_ref,
                    x_ref, *rest):
    """Pass 3: folded bn2 + residual (+ optional 1x1 conv) + relu, lane-dense store."""
    if use_1x1conv:
        w3_ref, b3_ref, out_ref = rest
    else:
        (out_ref,) = rest
    wp = W + 2
    core = H * wp
    core0 = _PADR + wp
    cin = x_ref.shape[2]
    cpad = y2_ref.shape[2]

    xr = x_ref[0, core0:core0 + core, :]            # residual slice, same row layout
    if use_1x1conv:
        res = jnp.dot(xr.astype(mxu_dtype), w3_ref[...],
                      preferred_element_type=jnp.float32) + b3_ref[...]
    else:
        res = xr
        if cpad > cin:
            res = jnp.concatenate(
                [res, jnp.zeros((core, cpad - cin), jnp.float32)], axis=1)

    out_ref[0] = jnp.maximum(y2_ref[0] * sc2_ref[...] + sh2_ref[...] + res, 0.0)


def _bn_fold(stats, gamma, beta, count):
    """Per-channel fold of [sum; sum_sq] partials into BN scale/shift (tiny)."""
    s = jnp.sum(stats[:, 0, :], axis=0)
    ss = jnp.sum(stats[:, 1, :], axis=0)
    mean = s / count
    # Single-pass variance, clamped at 0 against catastrophic cancellation.
    # TODO(synk): mean-shifted / two-pass formulation if |mean| >> std.
    var = jnp.maximum(ss / count - mean * mean, 0.0)
    scale = gamma * lax.rsqrt(var + _EPS)
    shift = beta - mean * scale
    return (scale.reshape(1, -1).astype(jnp.float32),
            shift.reshape(1, -1).astype(jnp.float32))


def residual_forward(x_nchw, params, use_1x1conv, mxu_dtype=jnp.bfloat16):
    """Fused Residual block forward. x_nchw: (N, outer_channels, H, W) float32."""
    x = jnp.transpose(x_nchw, (0, 2, 3, 1)).astype(jnp.float32)   # NCHW -> NHWC
    N, H, W, Cin = x.shape
    HP, WP = H + 2, W + 2
    RPI = HP * WP                   # rows of one image's zero-padded grid
    R_IMG = RPI + 2 * _PADR         # + zero margins so every tap window is in bounds
    CORE = H * WP                   # rows actually convolved per image
    count = float(N * H * W)        # BN population (valid output positions)

    w1_hwio = jnp.transpose(params["w1"], (2, 3, 1, 0)).astype(jnp.float32)
    w2_hwio = jnp.transpose(params["w2"], (2, 3, 1, 0)).astype(jnp.float32)
    Cmid, Cout = w1_hwio.shape[3], w2_hwio.shape[3]
    if not use_1x1conv:
        assert Cin == Cout, "identity residual requires matching outer channels"
    Cpad = ((Cout + _LANES - 1) // _LANES) * _LANES   # lane-dense final store

    # Flat padded layout: padded pixel (i, j) lives at row _PADR + i*WP + j.
    # TODO(synk): at scale, over-fetch these halos via index_map / manual DMA
    # instead of a wrapper-side jnp.pad (extra HBM round trip).
    xp = jnp.pad(x, ((0, 0), (1, 1), (1, 1), (0, 0))).reshape(N, RPI, Cin)
    xf = jnp.pad(xp, ((0, 0), (_PADR, _PADR), (0, 0)))             # (N, R_IMG, Cin)

    # Flat (rows, 1) validity masks — a single VPU multiply in-kernel.
    jc = jnp.arange(CORE, dtype=jnp.int32) % WP
    mask_core = ((jc >= 1) & (jc <= W)).astype(jnp.float32).reshape(CORE, 1)
    rf = jnp.arange(R_IMG, dtype=jnp.int32) - _PADR
    i_f, j_f = rf // WP, rf % WP
    mask_full = ((rf >= 0) & (rf < RPI) & (i_f >= 1) & (i_f <= H)
                 & (j_f >= 1) & (j_f <= W)).astype(jnp.float32).reshape(R_IMG, 1)

    # im2col weights, pre-cast to the MXU input dtype; conv biases b1/b2 dropped.
    w1 = w1_hwio.reshape(9 * Cin, Cmid).astype(mxu_dtype)
    w2 = jnp.zeros((9 * Cmid, Cpad), jnp.float32).at[:, :Cout].set(
        w2_hwio.reshape(9 * Cmid, Cout)).astype(mxu_dtype)

    def pad_c(v):
        return jnp.zeros((Cpad,), jnp.float32).at[:Cout].set(v.astype(jnp.float32))

    grid = (N,)
    cparams = pltpu.CompilerParams(
        dimension_semantics=("parallel",),          # both v7x TCs; harmless on v5e/v6e
        vmem_limit_bytes=48 * 1024 * 1024)          # sized for v7x's 64 MiB physical

    def img_spec(rows, ch):
        return pl.BlockSpec((1, rows, ch), lambda n: (n, 0, 0))

    def rep_spec(shape):
        return pl.BlockSpec(shape, lambda n, _s=shape: tuple(0 for _ in _s))

    # ---- pass 1: conv1 + BN1 partial stats ---------------------------------
    y1raw, st1 = pl.pallas_call(
        functools.partial(_conv1_kernel, H, W, mxu_dtype),
        grid=grid,
        in_specs=[img_spec(R_IMG, Cin), rep_spec((9 * Cin, Cmid)),
                  rep_spec((CORE, 1))],
        out_specs=(img_spec(R_IMG, Cmid), img_spec(2, Cmid)),
        out_shape=(jax.ShapeDtypeStruct((N, R_IMG, Cmid), jnp.float32),
                   jax.ShapeDtypeStruct((N, 2, Cmid), jnp.float32)),
        compiler_params=cparams,
    )(xf, w1, mask_core)

    sc1, sh1 = _bn_fold(st1, params["g1"].astype(jnp.float32),
                        params["be1"].astype(jnp.float32), count)

    # ---- pass 2: bn1 + relu, conv2, BN2 partial stats -----------------------
    y2raw, st2 = pl.pallas_call(
        functools.partial(_conv2_kernel, H, W, mxu_dtype),
        grid=grid,
        in_specs=[img_spec(R_IMG, Cmid), rep_spec((1, Cmid)), rep_spec((1, Cmid)),
                  rep_spec((9 * Cmid, Cpad)), rep_spec((R_IMG, 1)),
                  rep_spec((CORE, 1))],
        out_specs=(img_spec(CORE, Cpad), img_spec(2, Cpad)),
        out_shape=(jax.ShapeDtypeStruct((N, CORE, Cpad), jnp.float32),
                   jax.ShapeDtypeStruct((N, 2, Cpad), jnp.float32)),
        compiler_params=cparams,
    )(y1raw, sc1, sh1, w2, mask_full, mask_core)

    sc2, sh2 = _bn_fold(st2, pad_c(params["g2"]), pad_c(params["be2"]), count)

    # ---- pass 3: bn2 + residual (+1x1 conv) + relu, lane-dense store --------
    inputs = [y2raw, sc2, sh2, xf]
    in_specs = [img_spec(CORE, Cpad), rep_spec((1, Cpad)), rep_spec((1, Cpad)),
                img_spec(R_IMG, Cin)]
    if use_1x1conv:
        w3 = jnp.zeros((Cin, Cpad), jnp.float32).at[:, :Cout].set(
            jnp.transpose(params["w3"][:, :, 0, 0]).astype(jnp.float32)
        ).astype(mxu_dtype)
        inputs += [w3, pad_c(params["b3"]).reshape(1, Cpad)]
        in_specs += [rep_spec((Cin, Cpad)), rep_spec((1, Cpad))]

    out = pl.pallas_call(
        functools.partial(_bn2_res_kernel, H, W, use_1x1conv, mxu_dtype),
        grid=grid,
        in_specs=in_specs,
        out_specs=pl.BlockSpec((1, CORE, Cpad), lambda n: (n, 0, 0)),
        out_shape=jax.ShapeDtypeStruct((N, CORE, Cpad), jnp.float32),
        compiler_params=cparams,
    )(*inputs)

    # Drop the padded-grid border columns and the padded lanes; back to NCHW.
    out = out.reshape(N, H, WP, Cpad)[:, :, 1:W + 1, :Cout]
    return jnp.transpose(out, (0, 3, 1, 2))


# ---------------- pure-JAX reference (for correctness check) ----------------
def _ref_residual(x, params, use_1x1conv):
    def conv(x, w, b, pad):
        y = lax.conv_general_dilated(
            x, w, (1, 1), pad, dimension_numbers=("NCHW", "OIHW", "NCHW"))
        return y + b[None, :, None, None]

    def bn(y, g, be):
        mean = jnp.mean(y, axis=(0, 2, 3), keepdims=True)
        var = jnp.mean((y - mean) ** 2, axis=(0, 2, 3), keepdims=True)
        return ((y - mean) * lax.rsqrt(var + 1e-5)
                * g[None, :, None, None] + be[None, :, None, None])

    y = jax.nn.relu(bn(conv(x, params["w1"], params["b1"], "SAME"),
                       params["g1"], params["be1"]))
    y = bn(conv(y, params["w2"], params["b2"], "SAME"),
           params["g2"], params["be2"])
    if use_1x1conv:
        x = conv(x, params["w3"], params["b3"], "VALID")
    return jax.nn.relu(y + x)


if __name__ == "__main__":
    outer_channels, inner_channels = 8, 16
    N, H, W = 2, 16, 16

    key = jax.random.PRNGKey(0)
    ks = jax.random.split(key, 11)
    params = {
        "w1": 0.1 * jax.random.normal(ks[0], (inner_channels, outer_channels, 3, 3), jnp.float32),
        "b1": 0.1 * jax.random.normal(ks[1], (inner_channels,), jnp.float32),
        "w2": 0.1 * jax.random.normal(ks[2], (outer_channels, inner_channels, 3, 3), jnp.float32),
        "b2": 0.1 * jax.random.normal(ks[3], (outer_channels,), jnp.float32),
        "w3": 0.1 * jax.random.normal(ks[4], (outer_channels, outer_channels, 1, 1), jnp.float32),
        "b3": 0.1 * jax.random.normal(ks[5], (outer_channels,), jnp.float32),
        "g1": 1.0 + 0.1 * jax.random.normal(ks[6], (inner_channels,), jnp.float32),
        "be1": 0.1 * jax.random.normal(ks[7], (inner_channels,), jnp.float32),
        "g2": 1.0 + 0.1 * jax.random.normal(ks[8], (outer_channels,), jnp.float32),
        "be2": 0.1 * jax.random.normal(ks[9], (outer_channels,), jnp.float32),
    }
    x = jax.random.normal(ks[10], (N, outer_channels, H, W), jnp.float32)

    # bf16 MXU operands (recommended config) with a loosened tolerance, plus one
    # f32 run to verify exactness of the pipeline itself.
    configs = [(False, jnp.bfloat16, 3e-2),
               (True, jnp.bfloat16, 3e-2),
               (True, jnp.float32, 1e-4)]
    for use_1x1conv, mxu_dtype, tol in configs:
        out = jax.block_until_ready(
            residual_forward(x, params, use_1x1conv, mxu_dtype=mxu_dtype))
        ref = _ref_residual(x, params, use_1x1conv)
        assert out.shape == ref.shape
        err = float(jnp.max(jnp.abs(out - ref)))
        assert jnp.allclose(out, ref, atol=tol, rtol=tol), \
            f"use_1x1conv={use_1x1conv} dtype={mxu_dtype} max abs err {err}"

    print("KERNEL_OK")
</pallas_src>

<mosaic_0001>
module attributes {stable_mosaic.version = 11 : i64} {
  func.func @_conv1_kernel(%arg0: i32, %arg1: memref<1x340x8xf32, #tpu.memory_space<vmem>>, %arg2: memref<72x16xbf16, #tpu.memory_space<vmem>>, %arg3: memref<288x1xf32, #tpu.memory_space<vmem>>, %arg4: memref<1x340x16xf32, #tpu.memory_space<vmem>>, %arg5: memref<1x2x16xf32, #tpu.memory_space<vmem>>) attributes {dimension_semantics = [#tpu.dimension_semantics<parallel>], iteration_bounds = array<i64: 2>, scalar_prefetch = 0 : i64, scratch_operands = 0 : i64, tpu.core_type = #tpu.core_type<tc>, window_params = [{transform_indices = @transform_0, window_bounds = array<i64: 1, 340, 8>}, {pipeline_mode = #tpu.pipeline_mode<synchronous>, transform_indices = @transform_1, window_bounds = array<i64: 72, 16>}, {pipeline_mode = #tpu.pipeline_mode<synchronous>, transform_indices = @transform_2, window_bounds = array<i64: 288, 1>}, {transform_indices = @transform_3, window_bounds = array<i64: 1, 340, 16>}, {transform_indices = @transform_4, window_bounds = array<i64: 1, 2, 16>}]} {
    %c0 = arith.constant 0 : index
    %c0_0 = arith.constant 0 : index
    %c0_1 = arith.constant 0 : index
    %0 = vector.load %arg1[%c0, %c0_0, %c0_1] : memref<1x340x8xf32, #tpu.memory_space<vmem>>, vector<1x340x8xf32>
    %1 = vector.shape_cast %0 : vector<1x340x8xf32> to vector<340x8xf32>
    %2 = arith.truncf %1 : vector<340x8xf32> to vector<340x8xbf16>
    %3 = vector.extract_strided_slice %2 {offsets = [7, 0], sizes = [288, 8], strides = [1, 1]} : vector<340x8xbf16> to vector<288x8xbf16>
    %4 = vector.extract_strided_slice %2 {offsets = [8, 0], sizes = [288, 8], strides = [1, 1]} : vector<340x8xbf16> to vector<288x8xbf16>
    %5 = vector.extract_strided_slice %2 {offsets = [9, 0], sizes = [288, 8], strides = [1, 1]} : vector<340x8xbf16> to vector<288x8xbf16>
    %6 = vector.extract_strided_slice %2 {offsets = [25, 0], sizes = [288, 8], strides = [1, 1]} : vector<340x8xbf16> to vector<288x8xbf16>
    %7 = vector.extract_strided_slice %2 {offsets = [26, 0], sizes = [288, 8], strides = [1, 1]} : vector<340x8xbf16> to vector<288x8xbf16>
    %8 = vector.extract_strided_slice %2 {offsets = [27, 0], sizes = [288, 8], strides = [1, 1]} : vector<340x8xbf16> to vector<288x8xbf16>
    %9 = vector.extract_strided_slice %2 {offsets = [43, 0], sizes = [288, 8], strides = [1, 1]} : vector<340x8xbf16> to vector<288x8xbf16>
    %10 = vector.extract_strided_slice %2 {offsets = [44, 0], sizes = [288, 8], strides = [1, 1]} : vector<340x8xbf16> to vector<288x8xbf16>
    %11 = vector.extract_strided_slice %2 {offsets = [45, 0], sizes = [288, 8], strides = [1, 1]} : vector<340x8xbf16> to vector<288x8xbf16>
    %12 = tpu.concatenate %3, %4, %5, %6, %7, %8, %9, %10, %11 in 1 : vector<288x8xbf16>, vector<288x8xbf16>, vector<288x8xbf16>, vector<288x8xbf16>, vector<288x8xbf16>, vector<288x8xbf16>, vector<288x8xbf16>, vector<288x8xbf16>, vector<288x8xbf16> -> vector<288x72xbf16>
    %c0_2 = arith.constant 0 : index
    %c0_3 = arith.constant 0 : index
    %13 = vector.load %arg2[%c0_2, %c0_3] : memref<72x16xbf16, #tpu.memory_space<vmem>>, vector<72x16xbf16>
    %cst = arith.constant dense<0.000000e+00> : vector<288x16xf32>
    %14 = tpu.matmul %12, %13, %cst {dimension_numbers = #tpu.dot_dimension_numbers<[1], [0], [0], [1], [0, 0, 1, 1], [], []>} : vector<288x72xbf16>, vector<72x16xbf16>, vector<288x16xf32> -> vector<288x16xf32>
    %c0_4 = arith.constant 0 : index
    %c0_5 = arith.constant 0 : index
    %15 = vector.load %arg3[%c0_4, %c0_5] : memref<288x1xf32, #tpu.memory_space<vmem>>, vector<288x1xf32>
    %16 = vector.broadcast %15 : vector<288x1xf32> to vector<288x16xf32>
    %17 = arith.mulf %14, %16 : vector<288x16xf32>
    %cst_6 = arith.constant dense<0.000000e+00> : vector<16xf32>
    %18 = vector.multi_reduction <add>, %17, %cst_6 [0] : vector<288x16xf32> to vector<16xf32>
    %19 = vector.shape_cast %18 : vector<16xf32> to vector<1x16xf32>
    %20 = arith.mulf %17, %17 : vector<288x16xf32>
    %cst_7 = arith.constant dense<0.000000e+00> : vector<16xf32>
    %21 = vector.multi_reduction <add>, %20, %cst_7 [0] : vector<288x16xf32> to vector<16xf32>
    %22 = vector.shape_cast %21 : vector<16xf32> to vector<1x16xf32>
    %23 = tpu.concatenate %19, %22 in 0 : vector<1x16xf32>, vector<1x16xf32> -> vector<2x16xf32>
    %c0_8 = arith.constant 0 : index
    %c0_9 = arith.constant 0 : index
    %c0_10 = arith.constant 0 : index
    %24 = vector.load %arg5[%c0_8, %c0_9, %c0_10] : memref<1x2x16xf32, #tpu.memory_space<vmem>>, vector<1x2x16xf32>
    %25 = vector.shape_cast %24 : vector<1x2x16xf32> to vector<2x16xf32>
    %26 = vector.shape_cast %23 : vector<2x16xf32> to vector<1x2x16xf32>
    tpu.vector_store %arg5[%c0_8, %c0_9, %c0_10], %26 {strides = array<i32>} : memref<1x2x16xf32, #tpu.memory_space<vmem>>, vector<1x2x16xf32>,
    %cst_11 = arith.constant 0.000000e+00 : f32
    %27 = vector.broadcast %cst_11 : f32 to vector<26x16xf32>
    %c0_12 = arith.constant 0 : index
    %c0_13 = arith.constant 0 : index
    %c0_14 = arith.constant 0 : index
    %28 = vector.load %arg4[%c0_12, %c0_13, %c0_14] : memref<1x340x16xf32, #tpu.memory_space<vmem>>, vector<1x26x16xf32>
    %29 = vector.shape_cast %28 : vector<1x26x16xf32> to vector<26x16xf32>
    %30 = vector.shape_cast %27 : vector<26x16xf32> to vector<1x26x16xf32>
    tpu.vector_store %arg4[%c0_12, %c0_13, %c0_14], %30 {strides = array<i32>} : memref<1x340x16xf32, #tpu.memory_space<vmem>>, vector<1x26x16xf32>,
    %c0_15 = arith.constant 0 : index
    %c26 = arith.constant 26 : index
    %c0_16 = arith.constant 0 : index
    %31 = vector.load %arg4[%c0_15, %c26, %c0_16] : memref<1x340x16xf32, #tpu.memory_space<vmem>>, vector<1x288x16xf32>
    %32 = vector.shape_cast %31 : vector<1x288x16xf32> to vector<288x16xf32>
    %33 = vector.shape_cast %17 : vector<288x16xf32> to vector<1x288x16xf32>
    tpu.vector_store %arg4[%c0_15, %c26, %c0_16], %33 {strides = array<i32>} : memref<1x340x16xf32, #tpu.memory_space<vmem>>, vector<1x288x16xf32>,
    %cst_17 = arith.constant 0.000000e+00 : f32
    %34 = vector.broadcast %cst_17 : f32 to vector<26x16xf32>
    %c0_18 = arith.constant 0 : index
    %c314 = arith.constant 314 : index
    %c0_19 = arith.constant 0 : index
    %35 = vector.load %arg4[%c0_18, %c314, %c0_19] : memref<1x340x16xf32, #tpu.memory_space<vmem>>, vector<1x26x16xf32>
    %36 = vector.shape_cast %35 : vector<1x26x16xf32> to vector<26x16xf32>
    %37 = vector.shape_cast %34 : vector<26x16xf32> to vector<1x26x16xf32>
    tpu.vector_store %arg4[%c0_18, %c314, %c0_19], %37 {strides = array<i32>} : memref<1x340x16xf32, #tpu.memory_space<vmem>>, vector<1x26x16xf32>,
    return
  }
  func.func @transform_0(%arg0: i32) -> (i32, i32, i32) {
    %c0_i32 = arith.constant 0 : i32
    %c0_i32_0 = arith.constant 0 : i32
    %c0_i32_1 = arith.constant 0 : i32
    return %arg0, %c0_i32, %c0_i32_0 : i32, i32, i32
  }
  func.func @transform_1(%arg0: i32) -> (i32, i32) {
    %c0_i32 = arith.constant 0 : i32
    %c0_i32_0 = arith.constant 0 : i32
    %c0_i32_1 = arith.constant 0 : i32
    return %c0_i32, %c0_i32_0 : i32, i32
  }
  func.func @transform_2(%arg0: i32) -> (i32, i32) {
    %c0_i32 = arith.constant 0 : i32
    %c0_i32_0 = arith.constant 0 : i32
    %c0_i32_1 = arith.constant 0 : i32
    return %c0_i32, %c0_i32_0 : i32, i32
  }
  func.func @transform_3(%arg0: i32) -> (i32, i32, i32) {
    %c0_i32 = arith.constant 0 : i32
    %c0_i32_0 = arith.constant 0 : i32
    %c0_i32_1 = arith.constant 0 : i32
    return %arg0, %c0_i32, %c0_i32_0 : i32, i32, i32
  }
  func.func @transform_4(%arg0: i32) -> (i32, i32, i32) {
    %c0_i32 = arith.constant 0 : i32
    %c0_i32_0 = arith.constant 0 : i32
    %c0_i32_1 = arith.constant 0 : i32
    return %arg0, %c0_i32, %c0_i32_0 : i32, i32, i32
  }
}

</mosaic_0001>

<llo_original>
// kernel: tpu_custom_call.1
$region0: #{tpu_custom_call.1}
  #allocation0 [shape = 'u32[]', space=smem, size = 0x4, offset = 0x4, fixed_abs, tag = 'smem constant byte address 0x4 - core index']
  #allocation1 [shape = 'u32[144,128]{1,0:T(1,128)}', space=vmem, size = 0x12000, scoped, tag = 'internal scratch']
  %s0 = inlined_call_operand.vmem [shape: f32[2,340,8], index: 0, kind: input, shape index: {}]
  %s1 = inlined_call_operand.vmem [shape: bf16[72,16], index: 1, kind: input, shape index: {}]
  %s2 = inlined_call_operand.vmem [shape: f32[288,1], index: 2, kind: input, shape index: {}]
  %s3 = inlined_call_operand.vmem [shape: f32[2,340,16], index: 3, kind: output, shape index: {0}]
  %s4 = inlined_call_operand.hbm [shape: f32[2,2,16], index: 4, kind: output, shape index: {1}]
  %5 = xla_tuple %s3, %s4
  %s6 = sld [smem:[#allocation0]]
  $region53: #{tpu_custom_call.1} parent=0
    _
  %s8 = ssub.s32 1, %s6
  %s9 = scalar_select 0, %s8, %s6
  $region1: #{tpu_custom_call.1} parent=0
    #allocation2 [shape = 'u8[2048]{0}', space=vmem, size = 0x800, scoped, tag = 'output window, operand 1']
    #allocation3 [shape = 's32[2]{0}', space=sflag, size = 0x8, scoped, tag = 'scoped memory for tpu_custom_call.1']
    %10 = vsyncpa [#allocation3], 0
    %s11 = scalar_lea.sflag [#allocation3], 1
    %12 = vsyncpa %s11, 0
    loop: start=0, step=1, limit=4
    $region2: #{tpu_custom_call.1} parent=1 // loop_pre_header
      _
    $region3: #{tpu_custom_call.1} parent=1 // loop_header
      %s14 = sphi 0, %s18
      %p15 = scmp.ge.s32.totalorder %s14, 4
      %s24 = sphi 0, %s26
      %s27 = sphi 0, %s24
      %s28 = sphi 0, %s27
      %s44 = sphi 0, %s28
      %s48 = sphi 0, %s48
      %s50 = sphi 0, %s48
      %s51 = sphi 0, %s50
      %s65 = sphi 0, %s51
      %s69 = sphi 0, %s69
      %s71 = sphi 0, %s69
      %s72 = sphi 0, %s71
      %s86 = sphi 0, %s72
      %s92 = sphi 0, %s94
      %s95 = sphi 0, %s92
      %s96 = sphi 0, %s95
      %s112 = sphi 0, %s96
      %s118 = sphi 0, %s120
      %s121 = sphi 0, %s118
      %s122 = sphi 0, %s121
      %s138 = sphi 0, %s122
    $region4: #{tpu_custom_call.1} parent=1 // loop_header_branch
      %17 = sbr.rel (%p15) target = $region8
    $region5: #{tpu_custom_call.1} parent=1 // loop_body
      %s19 = ssub.s32 %s14, 1
      %s20 = ssub.s32 %s14, 2
      %s21 = sadd.s32 %s14, 1
      %s22 = ssub.s32 %s14, %s21
      %p23 = scmp.eq.s32.totalorder %s22, 0
      %s25 = sadd.s32 %s24, 1
      %s26 = scalar_select %p23, %s24, %s25
      %p29 = pneg %p23
      %p30 = scmp.eq.s32.totalorder %s14, 1
      %p31 = por %p29, %p30
      %p32 = scmp.ne.s32.totalorder %s24, %s27
      %p33 = scmp.eq.s32.totalorder %s14, 0
      %p34 = por %p32, %p33
      %p35 = scmp.ne.s32.totalorder %s24, %s27
      %p36 = scmp.eq.s32.totalorder %s19, 1
      %p37 = por %p35, %p36
      %p38 = scmp.ne.s32.totalorder %s27, %s28
      %p39 = scmp.eq.s32.totalorder %s19, 0
      %p40 = por %p38, %p39
      %p41 = scmp.ne.s32.totalorder %s27, %s28
      %p42 = scmp.eq.s32.totalorder %s20, 1
      %p43 = por %p41, %p42
      %p45 = scmp.ne.s32.totalorder %s28, %s44
      %p46 = scmp.eq.s32.totalorder %s20, 0
      %p47 = por %p45, %p46
      %s49 = sadd.s32 %s48, 1
      %p52 = scmp.eq.s32.totalorder %s14, 1
      %p53 = scmp.ne.s32.totalorder %s48, %s50
      %p54 = scmp.eq.s32.totalorder %s14, 0
      %p55 = por %p53, %p54
      %p56 = scmp.ne.s32.totalorder %s48, %s50
      %p57 = scmp.eq.s32.totalorder %s19, 1
      %p58 = por %p56, %p57
      %p59 = scmp.ne.s32.totalorder %s50, %s51
      %p60 = scmp.eq.s32.totalorder %s19, 0
      %p61 = por %p59, %p60
      %p62 = scmp.ne.s32.totalorder %s50, %s51
      %p63 = scmp.eq.s32.totalorder %s20, 1
      %p64 = por %p62, %p63
      %p66 = scmp.ne.s32.totalorder %s51, %s65
      %p67 = scmp.eq.s32.totalorder %s20, 0
      %p68 = por %p66, %p67
      %s70 = sadd.s32 %s69, 1
      %p73 = scmp.eq.s32.totalorder %s14, 1
      %p74 = scmp.ne.s32.totalorder %s69, %s71
      %p75 = scmp.eq.s32.totalorder %s14, 0
      %p76 = por %p74, %p75
      %p77 = scmp.ne.s32.totalorder %s69, %s71
      %p78 = scmp.eq.s32.totalorder %s19, 1
      %p79 = por %p77, %p78
      %p80 = scmp.ne.s32.totalorder %s71, %s72
      %p81 = scmp.eq.s32.totalorder %s19, 0
      %p82 = por %p80, %p81
      %p83 = scmp.ne.s32.totalorder %s71, %s72
      %p84 = scmp.eq.s32.totalorder %s20, 1
      %p85 = por %p83, %p84
      %p87 = scmp.ne.s32.totalorder %s72, %s86
      %p88 = scmp.eq.s32.totalorder %s20, 0
      %p89 = por %p87, %p88
      %s90 = ssub.s32 %s14, %s21
      %p91 = scmp.eq.s32.totalorder %s90, 0
      %s93 = sadd.s32 %s92, 1
      %s94 = scalar_select %p91, %s92, %s93
      %p97 = pneg %p91
      %p98 = scmp.eq.s32.totalorder %s14, 1
      %p99 = por %p97, %p98
      %p100 = scmp.ne.s32.totalorder %s92, %s95
      %p101 = scmp.eq.s32.totalorder %s14, 0
      %p102 = por %p100, %p101
      %p103 = scmp.ne.s32.totalorder %s92, %s95
      %p104 = scmp.eq.s32.totalorder %s19, 1
      %p105 = por %p103, %p104
      %p106 = scmp.ne.s32.totalorder %s95, %s96
      %p107 = scmp.eq.s32.totalorder %s19, 0
      %p108 = por %p106, %p107
      %p109 = scmp.ne.s32.totalorder %s95, %s96
      %p110 = scmp.eq.s32.totalorder %s20, 1
      %p111 = por %p109, %p110
      %p113 = scmp.ne.s32.totalorder %s96, %s112
      %p114 = scmp.eq.s32.totalorder %s20, 0
      %p115 = por %p113, %p114
      %s116 = ssub.s32 %s14, %s21
      %p117 = scmp.eq.s32.totalorder %s116, 0
      %s119 = sadd.s32 %s118, 1
      %s120 = scalar_select %p117, %s118, %s119
      %p123 = pneg %p117
      %p124 = scmp.eq.s32.totalorder %s14, 1
      %p125 = por %p123, %p124
      %p126 = scmp.ne.s32.totalorder %s118, %s121
      %p127 = scmp.eq.s32.totalorder %s14, 0
      %p128 = por %p126, %p127
      %p129 = scmp.ne.s32.totalorder %s118, %s121
      %p130 = scmp.eq.s32.totalorder %s19, 1
      %p131 = por %p129, %p130
      %p132 = scmp.ne.s32.totalorder %s121, %s122
      %p133 = scmp.eq.s32.totalorder %s19, 0
      %p134 = por %p132, %p133
      %p135 = scmp.ne.s32.totalorder %s121, %s122
      %p136 = scmp.eq.s32.totalorder %s20, 1
      %p137 = por %p135, %p136
      %p139 = scmp.ne.s32.totalorder %s122, %s138
      %p140 = scmp.eq.s32.totalorder %s20, 0
      %p141 = por %p139, %p140
      %p142 = scmp.le.s32.totalorder 1, %s14
      %p143 = scmp.lt.s32.totalorder %s14, 3
      %p144 = pnand %p142, %p143
      %p145 = pneg %p144
      // Predicated region
      $region9: #{tpu_custom_call.1} parent=5 // pred_check
        _
      $region10: #{tpu_custom_call.1} parent=5 // pred_check_branch
        %147 = sbr.rel (%p144) target = $region12
      $region11: #{tpu_custom_call.1} parent=5 // pred_region
        %s148 = ssub.s32 %s14, 1
        // Predicated region
        $region13: #{tpu_custom_call.1} parent=11 // pred_check
          %p149 = pneg %p61
        $region14: #{tpu_custom_call.1} parent=11 // pred_check_branch
          %151 = sbr.rel (%p149) target = $region16
        $region15: #{tpu_custom_call.1} parent=11 // pred_region
          _
        $region16: #{tpu_custom_call.1} parent=11 // pred_fallthru
          _
        // Predicated region
        $region17: #{tpu_custom_call.1} parent=11 // pred_check
          %p152 = pneg %p82
        $region18: #{tpu_custom_call.1} parent=11 // pred_check_branch
          %154 = sbr.rel (%p152) target = $region20
        $region19: #{tpu_custom_call.1} parent=11 // pred_region
          _
        $region20: #{tpu_custom_call.1} parent=11 // pred_fallthru
          _
      $region12: #{tpu_custom_call.1} parent=5 // pred_fallthru
        _
      %p155 = scmp.lt.s32.totalorder %s14, 2
      // Predicated region
      $region21: #{tpu_custom_call.1} parent=5 // pred_check
        %p156 = pneg %p155
      $region22: #{tpu_custom_call.1} parent=5 // pred_check_branch
        %158 = sbr.rel (%p156) target = $region24
      $region23: #{tpu_custom_call.1} parent=5 // pred_region
        // Predicated region
        $region25: #{tpu_custom_call.1} parent=23 // pred_check
          %p159 = pneg %p34
        $region26: #{tpu_custom_call.1} parent=23 // pred_check_branch
          %161 = sbr.rel (%p159) target = $region28
        $region27: #{tpu_custom_call.1} parent=23 // pred_region
          %p162 = scmp.lt.s32.totalorder %s14, 1
          %s163 = scalar_select %p162, %s14, 1
          %s164 = smul.addr %s163, 43
          %s165 = smul.addr %s164, 8
          %s166 = scalar_lea.vmem %s0, %s165
        $region28: #{tpu_custom_call.1} parent=23 // pred_fallthru
          _
      $region24: #{tpu_custom_call.1} parent=5 // pred_fallthru
        _
      %p167 = scmp.le.s32.totalorder 1, %s14
      %p168 = scmp.lt.s32.totalorder %s14, 3
      %p169 = pnand %p167, %p168
      %p170 = pneg %p169
      // Predicated region
      $region29: #{tpu_custom_call.1} parent=5 // pred_check
        _
      $region30: #{tpu_custom_call.1} parent=5 // pred_check_branch
        %172 = sbr.rel (%p169) target = $region32
      $region31: #{tpu_custom_call.1} parent=5 // pred_region
        %s173 = ssub.s32 %s14, 1
        %p174 = scmp.lt.s32.totalorder %s19, 1
        %s175 = scalar_select %p174, %s19, 1
        %s176 = smul.addr %s175, 43
        %s177 = smul.addr %s176, 8
        %s178 = scalar_lea.vmem %s0, %s177
        %p179 = pneg %p40
        %p180 = pneg %p37
        %p181 = pneg %p61
        %p182 = pneg %p58
        %p183 = pneg %p82
        %p184 = pneg %p79
        %p185 = pneg %p108
        %p186 = pneg %p105
        %p187 = scmp.lt.s32.totalorder %s19, 1
        %s188 = scalar_select %p187, %s19, 1
        %s189 = smul.addr %s188, 43
        %s190 = smul.addr %s189, 8
        %s191 = scalar_lea.vmem %s3, %s190
        %p192 = pneg %p134
        %p193 = pneg %p131
        %s194 = sand.u32 %s121, 1
        %s195 = scalar_lea.sflag [#allocation3], %s194
        %s196 = sand.u32 %s121, 1
        %s197 = smul.addr %s196, 2
        %s198 = scalar_lea.vmem [#allocation2], %s197
        %p199 = scmp.lt.s32.totalorder %s19, 1
        %s200 = scalar_select %p199, %s19, 1
        %s201 = smul.addr %s200, 43
        %s202 = smul.addr %s201, 8
        %s203 = scalar_lea.vmem %s0, %s202
        %p204 = scmp.lt.s32.totalorder %s19, 1
        %s205 = scalar_select %p204, %s19, 1
        %s206 = smul.addr %s205, 43
        %s207 = smul.addr %s206, 8
        %s208 = scalar_lea.vmem %s3, %s207
        %v210 = vld [vmem:[%s203] sm:$0xff]
        %v211 = vld [vmem:[%s203 + $0x8] sm:$0xff]
        %v212 = vld [vmem:[%s203 + $0x10] sm:$0xff]
        %v213 = vld [vmem:[%s203 + $0x18] sm:$0xff]
        %v214 = vld [vmem:[%s203 + $0x20] sm:$0xff]
        %v215 = vld [vmem:[%s203 + $0x28] sm:$0xff]
        %v216 = vld [vmem:[%s203 + $0x30] sm:$0xff]
        %v217 = vld [vmem:[%s203 + $0x38] sm:$0xff]
        %v218 = vld [vmem:[%s203 + $0x40] sm:$0xff]
        %v219 = vld [vmem:[%s203 + $0x48] sm:$0xff]
        %v220 = vld [vmem:[%s203 + $0x50] sm:$0xff]
        %v221 = vld [vmem:[%s203 + $0x58] sm:$0xff]
        %v222 = vld [vmem:[%s203 + $0x60] sm:$0xff]
        %v223 = vld [vmem:[%s203 + $0x68] sm:$0xff]
        %v224 = vld [vmem:[%s203 + $0x70] sm:$0xff]
        %v225 = vld [vmem:[%s203 + $0x78] sm:$0xff]
        %v226 = vld [vmem:[%s203 + $0x80] sm:$0xff]
        %v227 = vld [vmem:[%s203 + $0x88] sm:$0xff]
        %v228 = vld [vmem:[%s203 + $0x90] sm:$0xff]
        %v229 = vld [vmem:[%s203 + $0x98] sm:$0xff]
        %v230 = vld [vmem:[%s203 + $0xa0] sm:$0xff]
        %v231 = vld [vmem:[%s203 + $0xa8] sm:$0xff]
        %v232 = vld [vmem:[%s203 + $0xb0] sm:$0xff]
        %v233 = vld [vmem:[%s203 + $0xb8] sm:$0xff]
        %v234 = vld [vmem:[%s203 + $0xc0] sm:$0xff]
        %v235 = vld [vmem:[%s203 + $0xc8] sm:$0xff]
        %v236 = vld [vmem:[%s203 + $0xd0] sm:$0xff]
        %v237 = vld [vmem:[%s203 + $0xd8] sm:$0xff]
        %v238 = vld [vmem:[%s203 + $0xe0] sm:$0xff]
        %v239 = vld [vmem:[%s203 + $0xe8] sm:$0xff]
        %v240 = vld [vmem:[%s203 + $0xf0] sm:$0xff]
        %v241 = vld [vmem:[%s203 + $0xf8] sm:$0xff]
        %v242 = vld [vmem:[%s203 + $0x100] sm:$0xff]
        %v243 = vld [vmem:[%s203 + $0x108] sm:$0xff]
        %v244 = vld [vmem:[%s203 + $0x110] sm:$0xff]
        %v245 = vld [vmem:[%s203 + $0x118] sm:$0xff]
        %v246 = vld [vmem:[%s203 + $0x120] sm:$0xff]
        %v247 = vld [vmem:[%s203 + $0x128] sm:$0xff]
        %v248 = vld [vmem:[%s203 + $0x130] sm:$0xff]
        %v249 = vld [vmem:[%s203 + $0x138] sm:$0xff]
        %v250 = vld [vmem:[%s203 + $0x140] sm:$0xff]
        %v251 = vld [vmem:[%s203 + $0x148] sm:$0xff]
        %v252 = vpack.c.bf16 %v211, %v210
        %v253 = vpack.c.bf16 %v213, %v212
        %v254 = vpack.c.bf16 %v215, %v214
        %v255 = vpack.c.bf16 %v217, %v216
        %v256 = vpack.c.bf16 %v219, %v218
        %v257 = vpack.c.bf16 %v221, %v220
        %v258 = vpack.c.bf16 %v223, %v222
        %v259 = vpack.c.bf16 %v225, %v224
        %v260 = vpack.c.bf16 %v227, %v226
        %v261 = vpack.c.bf16 %v229, %v228
        %v262 = vpack.c.bf16 %v231, %v230
        %v263 = vpack.c.bf16 %v233, %v232
        %v264 = vpack.c.bf16 %v235, %v234
        %v265 = vpack.c.bf16 %v237, %v236
        %v266 = vpack.c.bf16 %v239, %v238
        %v267 = vpack.c.bf16 %v241, %v240
        %v268 = vpack.c.bf16 %v243, %v242
        %v269 = vpack.c.bf16 %v245, %v244
        %v270 = vpack.c.bf16 %v247, %v246
        %v271 = vpack.c.bf16 %v249, %v248
        %v272 = vpack.c.bf16 %v251, %v250
        %vm273 = vsmask.f32 7424
        %v275 = vshrl.u32 %v252, 16
        %v277 = vshll.u32 %v252, 16
        %v279 = vrot.slane %v277, 1
        %v280 = vor.u32 %v275, %v279
        %v282 = vshll.u32 %v253, 16
        %v284 = vrot.slane %v282, 1
        %v285 = vsel %vm273, %v280, %v284
        %v286 = vshrl.u32 %v253, 16
        %v288 = vor.u32 %v286, %v284
        %v290 = vshll.u32 %v254, 16
        %v292 = vrot.slane %v290, 1
        %v293 = vsel %vm273, %v288, %v292
        %v294 = vshrl.u32 %v254, 16
        %v296 = vor.u32 %v294, %v292
        %v298 = vshll.u32 %v255, 16
        %v300 = vrot.slane %v298, 1
        %v301 = vsel %vm273, %v296, %v300
        %v302 = vshrl.u32 %v255, 16
        %v304 = vor.u32 %v302, %v300
        %v306 = vshll.u32 %v256, 16
        %v308 = vrot.slane %v306, 1
        %v309 = vsel %vm273, %v304, %v308
        %v310 = vshrl.u32 %v256, 16
        %v312 = vor.u32 %v310, %v308
        %v314 = vshll.u32 %v257, 16
        %v316 = vrot.slane %v314, 1
        %v317 = vsel %vm273, %v312, %v316
        %v318 = vshrl.u32 %v257, 16
        %v320 = vor.u32 %v318, %v316
        %v322 = vshll.u32 %v258, 16
        %v324 = vrot.slane %v322, 1
        %v325 = vsel %vm273, %v320, %v324
        %v326 = vshrl.u32 %v258, 16
        %v328 = vor.u32 %v326, %v324
        %v330 = vshll.u32 %v259, 16
        %v332 = vrot.slane %v330, 1
        %v333 = vsel %vm273, %v328, %v332
        %v334 = vshrl.u32 %v259, 16
        %v336 = vor.u32 %v334, %v332
        %v338 = vshll.u32 %v260, 16
        %v340 = vrot.slane %v338, 1
        %v341 = vsel %vm273, %v336, %v340
        %v342 = vshrl.u32 %v260, 16
        %v344 = vor.u32 %v342, %v340
        %v346 = vshll.u32 %v261, 16
        %v348 = vrot.slane %v346, 1
        %v349 = vsel %vm273, %v344, %v348
        %v350 = vshrl.u32 %v261, 16
        %v352 = vor.u32 %v350, %v348
        %v354 = vshll.u32 %v262, 16
        %v356 = vrot.slane %v354, 1
        %v357 = vsel %vm273, %v352, %v356
        %v358 = vshrl.u32 %v262, 16
        %v360 = vor.u32 %v358, %v356
        %v362 = vshll.u32 %v263, 16
        %v364 = vrot.slane %v362, 1
        %v365 = vsel %vm273, %v360, %v364
        %v366 = vshrl.u32 %v263, 16
        %v368 = vor.u32 %v366, %v364
        %v370 = vshll.u32 %v264, 16
        %v372 = vrot.slane %v370, 1
        %v373 = vsel %vm273, %v368, %v372
        %v374 = vshrl.u32 %v264, 16
        %v376 = vor.u32 %v374, %v372
        %v378 = vshll.u32 %v265, 16
        %v380 = vrot.slane %v378, 1
        %v381 = vsel %vm273, %v376, %v380
        %v382 = vshrl.u32 %v265, 16
        %v384 = vor.u32 %v382, %v380
        %v386 = vshll.u32 %v266, 16
        %v388 = vrot.slane %v386, 1
        %v389 = vsel %vm273, %v384, %v388
        %v390 = vshrl.u32 %v266, 16
        %v392 = vor.u32 %v390, %v388
        %v394 = vshll.u32 %v267, 16
        %v396 = vrot.slane %v394, 1
        %v397 = vsel %vm273, %v392, %v396
        %v398 = vshrl.u32 %v267, 16
        %v400 = vor.u32 %v398, %v396
        %v402 = vshll.u32 %v268, 16
        %v404 = vrot.slane %v402, 1
        %v405 = vsel %vm273, %v400, %v404
        %v406 = vshrl.u32 %v268, 16
        %v408 = vor.u32 %v406, %v404
        %v410 = vshll.u32 %v269, 16
        %v412 = vrot.slane %v410, 1
        %v413 = vsel %vm273, %v408, %v412
        %v414 = vshrl.u32 %v269, 16
        %v416 = vor.u32 %v414, %v412
        %v418 = vshll.u32 %v270, 16
        %v420 = vrot.slane %v418, 1
        %v421 = vsel %vm273, %v416, %v420
        %v422 = vshrl.u32 %v270, 16
        %v424 = vor.u32 %v422, %v420
        %425 = vrot.lane.b32.xlu0 %v285, 8
        %v426 = vpop.permute.xlu0 %425
        %427 = vrot.lane.b32.xlu0 %v293, 8
        %v428 = vpop.permute.xlu0 %427
        %429 = vrot.lane.b32.xlu0 %v301, 8
        %v430 = vpop.permute.xlu0 %429
        %431 = vrot.lane.b32.xlu0 %v309, 8
        %v432 = vpop.permute.xlu0 %431
        %433 = vrot.lane.b32.xlu0 %v317, 8
        %v434 = vpop.permute.xlu0 %433
        %435 = vrot.lane.b32.xlu0 %v325, 8
        %v436 = vpop.permute.xlu0 %435
        %437 = vrot.lane.b32.xlu0 %v333, 8
        %v438 = vpop.permute.xlu0 %437
        %439 = vrot.lane.b32.xlu0 %v341, 8
        %v440 = vpop.permute.xlu0 %439
        %441 = vrot.lane.b32.xlu0 %v349, 8
        %v442 = vpop.permute.xlu0 %441
        %443 = vrot.lane.b32.xlu0 %v357, 8
        %v444 = vpop.permute.xlu0 %443
        %445 = vrot.lane.b32.xlu0 %v365, 8
        %v446 = vpop.permute.xlu0 %445
        %447 = vrot.lane.b32.xlu0 %v373, 8
        %v448 = vpop.permute.xlu0 %447
        %449 = vrot.lane.b32.xlu0 %v381, 8
        %v450 = vpop.permute.xlu0 %449
        %451 = vrot.lane.b32.xlu0 %v389, 8
        %v452 = vpop.permute.xlu0 %451
        %453 = vrot.lane.b32.xlu0 %v397, 8
        %v454 = vpop.permute.xlu0 %453
        %455 = vrot.lane.b32.xlu0 %v405, 8
        %v456 = vpop.permute.xlu0 %455
        %457 = vrot.lane.b32.xlu0 %v413, 8
        %v458 = vpop.permute.xlu0 %457
        %459 = vrot.lane.b32.xlu0 %v421, 8
        %v460 = vpop.permute.xlu0 %459
        %461 = vrot.lane.b32.xlu0 %v424, 8
        %v462 = vpop.permute.xlu0 %461
        %vm482 = vcmask 1046528
        %v483 = vrot.slane %v252, 1
        %v484 = vrot.slane %v253, 1
        %v485 = vsel %vm482, %v483, %v484
        %v486 = vrot.slane %v254, 1
        %v487 = vsel %vm482, %v484, %v486
        %v488 = vrot.slane %v255, 1
        %v489 = vsel %vm482, %v486, %v488
        %v490 = vrot.slane %v256, 1
        %v491 = vsel %vm482, %v488, %v490
        %v492 = vrot.slane %v257, 1
        %v493 = vsel %vm482, %v490, %v492
        %v494 = vrot.slane %v258, 1
        %v495 = vsel %vm482, %v492, %v494
        %v496 = vrot.slane %v259, 1
        %v497 = vsel %vm482, %v494, %v496
        %v498 = vrot.slane %v260, 1
        %v499 = vsel %vm482, %v496, %v498
        %v500 = vrot.slane %v261, 1
        %v501 = vsel %vm482, %v498, %v500
        %v502 = vrot.slane %v262, 1
        %v503 = vsel %vm482, %v500, %v502
        %v504 = vrot.slane %v263, 1
        %v505 = vsel %vm482, %v502, %v504
        %v506 = vrot.slane %v264, 1
        %v507 = vsel %vm482, %v504, %v506
        %v508 = vrot.slane %v265, 1
        %v509 = vsel %vm482, %v506, %v508
        %v510 = vrot.slane %v266, 1
        %v511 = vsel %vm482, %v508, %v510
        %v512 = vrot.slane %v267, 1
        %v513 = vsel %vm482, %v510, %v512
        %v514 = vrot.slane %v268, 1
        %v515 = vsel %vm482, %v512, %v514
        %v516 = vrot.slane %v269, 1
        %v517 = vsel %vm482, %v514, %v516
        %v518 = vrot.slane %v270, 1
        %v519 = vsel %vm482, %v516, %v518
        %520 = vrot.lane.b32.xlu0 %v485, 16
        %v521 = vpop.permute.xlu0 %520
        %522 = vrot.lane.b32.xlu0 %v487, 16
        %v523 = vpop.permute.xlu0 %522
        %524 = vrot.lane.b32.xlu0 %v489, 16
        %v525 = vpop.permute.xlu0 %524
        %526 = vrot.lane.b32.xlu0 %v491, 16
        %v527 = vpop.permute.xlu0 %526
        %528 = vrot.lane.b32.xlu0 %v493, 16
        %v529 = vpop.permute.xlu0 %528
        %530 = vrot.lane.b32.xlu0 %v495, 16
        %v531 = vpop.permute.xlu0 %530
        %532 = vrot.lane.b32.xlu0 %v497, 16
        %v533 = vpop.permute.xlu0 %532
        %534 = vrot.lane.b32.xlu0 %v499, 16
        %v535 = vpop.permute.xlu0 %534
        %536 = vrot.lane.b32.xlu0 %v501, 16
        %v537 = vpop.permute.xlu0 %536
        %538 = vrot.lane.b32.xlu0 %v503, 16
        %v539 = vpop.permute.xlu0 %538
        %540 = vrot.lane.b32.xlu0 %v505, 16
        %v541 = vpop.permute.xlu0 %540
        %542 = vrot.lane.b32.xlu0 %v507, 16
        %v543 = vpop.permute.xlu0 %542
        %544 = vrot.lane.b32.xlu0 %v509, 16
        %v545 = vpop.permute.xlu0 %544
        %546 = vrot.lane.b32.xlu0 %v511, 16
        %v547 = vpop.permute.xlu0 %546
        %548 = vrot.lane.b32.xlu0 %v513, 16
        %v549 = vpop.permute.xlu0 %548
        %550 = vrot.lane.b32.xlu0 %v515, 16
        %v551 = vpop.permute.xlu0 %550
        %552 = vrot.lane.b32.xlu0 %v517, 16
        %v553 = vpop.permute.xlu0 %552
        %554 = vrot.lane.b32.xlu0 %v519, 16
        %v555 = vpop.permute.xlu0 %554
        %556 = vrot.lane.b32.xlu0 %v518, 16
        %v557 = vpop.permute.xlu0 %556
        %v559 = vrot.slane %v271, 1
        %v560 = vsel %vm482, %v518, %v559
        %561 = vrot.lane.b32.xlu0 %v487, 24
        %v562 = vpop.permute.xlu0 %561
        %563 = vrot.lane.b32.xlu0 %v489, 24
        %v564 = vpop.permute.xlu0 %563
        %565 = vrot.lane.b32.xlu0 %v491, 24
        %v566 = vpop.permute.xlu0 %565
        %567 = vrot.lane.b32.xlu0 %v493, 24
        %v568 = vpop.permute.xlu0 %567
        %569 = vrot.lane.b32.xlu0 %v495, 24
        %v570 = vpop.permute.xlu0 %569
        %571 = vrot.lane.b32.xlu0 %v497, 24
        %v572 = vpop.permute.xlu0 %571
        %573 = vrot.lane.b32.xlu0 %v499, 24
        %v574 = vpop.permute.xlu0 %573
        %575 = vrot.lane.b32.xlu0 %v501, 24
        %v576 = vpop.permute.xlu0 %575
        %577 = vrot.lane.b32.xlu0 %v503, 24
        %v578 = vpop.permute.xlu0 %577
        %579 = vrot.lane.b32.xlu0 %v505, 24
        %v580 = vpop.permute.xlu0 %579
        %581 = vrot.lane.b32.xlu0 %v507, 24
        %v582 = vpop.permute.xlu0 %581
        %583 = vrot.lane.b32.xlu0 %v509, 24
        %v584 = vpop.permute.xlu0 %583
        %585 = vrot.lane.b32.xlu0 %v511, 24
        %v586 = vpop.permute.xlu0 %585
        %587 = vrot.lane.b32.xlu0 %v513, 24
        %v588 = vpop.permute.xlu0 %587
        %589 = vrot.lane.b32.xlu0 %v515, 24
        %v590 = vpop.permute.xlu0 %589
        %591 = vrot.lane.b32.xlu0 %v517, 24
        %v592 = vpop.permute.xlu0 %591
        %593 = vrot.lane.b32.xlu0 %v519, 24
        %v594 = vpop.permute.xlu0 %593
        %595 = vrot.lane.b32.xlu0 %v560, 24
        %v596 = vpop.permute.xlu0 %595
        %597 = vrot.lane.b32.xlu0 %v559, 24
        %v598 = vpop.permute.xlu0 %597
        %vm599 = vsmask.f32 6400
        %v600 = vrot.slane %v286, 1
        %v601 = vrot.slane %v282, 2
        %v602 = vor.u32 %v600, %v601
        %v603 = vrot.slane %v294, 1
        %v604 = vrot.slane %v290, 2
        %v605 = vor.u32 %v603, %v604
        %v606 = vsel %vm599, %v602, %v605
        %v607 = vrot.slane %v302, 1
        %v608 = vrot.slane %v298, 2
        %v609 = vor.u32 %v607, %v608
        %v610 = vsel %vm599, %v605, %v609
        %v611 = vrot.slane %v310, 1
        %v612 = vrot.slane %v306, 2
        %v613 = vor.u32 %v611, %v612
        %v614 = vsel %vm599, %v609, %v613
        %v615 = vrot.slane %v318, 1
        %v616 = vrot.slane %v314, 2
        %v617 = vor.u32 %v615, %v616
        %v618 = vsel %vm599, %v613, %v617
        %v619 = vrot.slane %v326, 1
        %v620 = vrot.slane %v322, 2
        %v621 = vor.u32 %v619, %v620
        %v622 = vsel %vm599, %v617, %v621
        %v623 = vrot.slane %v334, 1
        %v624 = vrot.slane %v330, 2
        %v625 = vor.u32 %v623, %v624
        %v626 = vsel %vm599, %v621, %v625
        %v627 = vrot.slane %v342, 1
        %v628 = vrot.slane %v338, 2
        %v629 = vor.u32 %v627, %v628
        %v630 = vsel %vm599, %v625, %v629
        %v631 = vrot.slane %v350, 1
        %v632 = vrot.slane %v346, 2
        %v633 = vor.u32 %v631, %v632
        %v634 = vsel %vm599, %v629, %v633
        %v635 = vrot.slane %v358, 1
        %v636 = vrot.slane %v354, 2
        %v637 = vor.u32 %v635, %v636
        %v638 = vsel %vm599, %v633, %v637
        %v639 = vrot.slane %v366, 1
        %v640 = vrot.slane %v362, 2
        %v641 = vor.u32 %v639, %v640
        %v642 = vsel %vm599, %v637, %v641
        %v643 = vrot.slane %v374, 1
        %v644 = vrot.slane %v370, 2
        %v645 = vor.u32 %v643, %v644
        %v646 = vsel %vm599, %v641, %v645
        %v647 = vrot.slane %v382, 1
        %v648 = vrot.slane %v378, 2
        %v649 = vor.u32 %v647, %v648
        %v650 = vsel %vm599, %v645, %v649
        %v651 = vrot.slane %v390, 1
        %v652 = vrot.slane %v386, 2
        %v653 = vor.u32 %v651, %v652
        %v654 = vsel %vm599, %v649, %v653
        %v655 = vrot.slane %v398, 1
        %v656 = vrot.slane %v394, 2
        %v657 = vor.u32 %v655, %v656
        %v658 = vsel %vm599, %v653, %v657
        %v659 = vrot.slane %v406, 1
        %v660 = vrot.slane %v402, 2
        %v661 = vor.u32 %v659, %v660
        %v662 = vsel %vm599, %v657, %v661
        %v663 = vrot.slane %v414, 1
        %v664 = vrot.slane %v410, 2
        %v665 = vor.u32 %v663, %v664
        %v666 = vsel %vm599, %v661, %v665
        %v667 = vrot.slane %v422, 1
        %v668 = vrot.slane %v418, 2
        %v669 = vor.u32 %v667, %v668
        %v670 = vsel %vm599, %v665, %v669
        %v672 = vshrl.u32 %v271, 16
        %v674 = vrot.slane %v672, 1
        %v675 = vshll.u32 %v271, 16
        %v677 = vrot.slane %v675, 2
        %v678 = vor.u32 %v674, %v677
        %v679 = vsel %vm599, %v669, %v678
        %680 = vrot.lane.b32.xlu0 %v606, 32
        %v681 = vpop.permute.xlu0 %680
        %682 = vrot.lane.b32.xlu0 %v610, 32
        %v683 = vpop.permute.xlu0 %682
        %684 = vrot.lane.b32.xlu0 %v614, 32
        %v685 = vpop.permute.xlu0 %684
        %686 = vrot.lane.b32.xlu0 %v618, 32
        %v687 = vpop.permute.xlu0 %686
        %688 = vrot.lane.b32.xlu0 %v622, 32
        %v689 = vpop.permute.xlu0 %688
        %690 = vrot.lane.b32.xlu0 %v626, 32
        %v691 = vpop.permute.xlu0 %690
        %692 = vrot.lane.b32.xlu0 %v630, 32
        %v693 = vpop.permute.xlu0 %692
        %694 = vrot.lane.b32.xlu0 %v634, 32
        %v695 = vpop.permute.xlu0 %694
        %696 = vrot.lane.b32.xlu0 %v638, 32
        %v697 = vpop.permute.xlu0 %696
        %698 = vrot.lane.b32.xlu0 %v642, 32
        %v699 = vpop.permute.xlu0 %698
        %700 = vrot.lane.b32.xlu0 %v646, 32
        %v701 = vpop.permute.xlu0 %700
        %702 = vrot.lane.b32.xlu0 %v650, 32
        %v703 = vpop.permute.xlu0 %702
        %704 = vrot.lane.b32.xlu0 %v654, 32
        %v705 = vpop.permute.xlu0 %704
        %706 = vrot.lane.b32.xlu0 %v658, 32
        %v707 = vpop.permute.xlu0 %706
        %708 = vrot.lane.b32.xlu0 %v662, 32
        %v709 = vpop.permute.xlu0 %708
        %710 = vrot.lane.b32.xlu0 %v666, 32
        %v711 = vpop.permute.xlu0 %710
        %712 = vrot.lane.b32.xlu0 %v670, 32
        %v713 = vpop.permute.xlu0 %712
        %714 = vrot.lane.b32.xlu0 %v679, 32
        %v715 = vpop.permute.xlu0 %714
        %716 = vrot.lane.b32.xlu0 %v678, 32
        %v717 = vpop.permute.xlu0 %716
        %vm718 = vcmask 1045504
        %v719 = vrot.slane %v253, 2
        %v720 = vrot.slane %v254, 2
        %v721 = vsel %vm718, %v719, %v720
        %v722 = vrot.slane %v255, 2
        %v723 = vsel %vm718, %v720, %v722
        %v724 = vrot.slane %v256, 2
        %v725 = vsel %vm718, %v722, %v724
        %v726 = vrot.slane %v257, 2
        %v727 = vsel %vm718, %v724, %v726
        %v728 = vrot.slane %v258, 2
        %v729 = vsel %vm718, %v726, %v728
        %v730 = vrot.slane %v259, 2
        %v731 = vsel %vm718, %v728, %v730
        %v732 = vrot.slane %v260, 2
        %v733 = vsel %vm718, %v730, %v732
        %v734 = vrot.slane %v261, 2
        %v735 = vsel %vm718, %v732, %v734
        %v736 = vrot.slane %v262, 2
        %v737 = vsel %vm718, %v734, %v736
        %v738 = vrot.slane %v263, 2
        %v739 = vsel %vm718, %v736, %v738
        %v740 = vrot.slane %v264, 2
        %v741 = vsel %vm718, %v738, %v740
        %v742 = vrot.slane %v265, 2
        %v743 = vsel %vm718, %v740, %v742
        %v744 = vrot.slane %v266, 2
        %v745 = vsel %vm718, %v742, %v744
        %v746 = vrot.slane %v267, 2
        %v747 = vsel %vm718, %v744, %v746
        %v748 = vrot.slane %v268, 2
        %v749 = vsel %vm718, %v746, %v748
        %v750 = vrot.slane %v269, 2
        %v751 = vsel %vm718, %v748, %v750
        %v752 = vrot.slane %v270, 2
        %v753 = vsel %vm718, %v750, %v752
        %v754 = vrot.slane %v271, 2
        %v755 = vsel %vm718, %v752, %v754
        %756 = vrot.lane.b32.xlu0 %v721, 40
        %v757 = vpop.permute.xlu0 %756
        %758 = vrot.lane.b32.xlu0 %v723, 40
        %v759 = vpop.permute.xlu0 %758
        %760 = vrot.lane.b32.xlu0 %v725, 40
        %v761 = vpop.permute.xlu0 %760
        %762 = vrot.lane.b32.xlu0 %v727, 40
        %v763 = vpop.permute.xlu0 %762
        %764 = vrot.lane.b32.xlu0 %v729, 40
        %v765 = vpop.permute.xlu0 %764
        %766 = vrot.lane.b32.xlu0 %v731, 40
        %v767 = vpop.permute.xlu0 %766
        %768 = vrot.lane.b32.xlu0 %v733, 40
        %v769 = vpop.permute.xlu0 %768
        %770 = vrot.lane.b32.xlu0 %v735, 40
        %v771 = vpop.permute.xlu0 %770
        %772 = vrot.lane.b32.xlu0 %v737, 40
        %v773 = vpop.permute.xlu0 %772
        %774 = vrot.lane.b32.xlu0 %v739, 40
        %v775 = vpop.permute.xlu0 %774
        %776 = vrot.lane.b32.xlu0 %v741, 40
        %v777 = vpop.permute.xlu0 %776
        %778 = vrot.lane.b32.xlu0 %v743, 40
        %v779 = vpop.permute.xlu0 %778
        %780 = vrot.lane.b32.xlu0 %v745, 40
        %v781 = vpop.permute.xlu0 %780
        %782 = vrot.lane.b32.xlu0 %v747, 40
        %v783 = vpop.permute.xlu0 %782
        %784 = vrot.lane.b32.xlu0 %v749, 40
        %v785 = vpop.permute.xlu0 %784
        %786 = vrot.lane.b32.xlu0 %v751, 40
        %v787 = vpop.permute.xlu0 %786
        %788 = vrot.lane.b32.xlu0 %v753, 40
        %v789 = vpop.permute.xlu0 %788
        %790 = vrot.lane.b32.xlu0 %v755, 40
        %v791 = vpop.permute.xlu0 %790
        %792 = vrot.lane.b32.xlu0 %v754, 40
        %v793 = vpop.permute.xlu0 %792
        %v795 = vrot.slane %v272, 2
        %v796 = vsel %vm718, %v754, %v795
        %797 = vrot.lane.b32.xlu0 %v723, 48
        %v798 = vpop.permute.xlu0 %797
        %799 = vrot.lane.b32.xlu0 %v725, 48
        %v800 = vpop.permute.xlu0 %799
        %801 = vrot.lane.b32.xlu0 %v727, 48
        %v802 = vpop.permute.xlu0 %801
        %803 = vrot.lane.b32.xlu0 %v729, 48
        %v804 = vpop.permute.xlu0 %803
        %805 = vrot.lane.b32.xlu0 %v731, 48
        %v806 = vpop.permute.xlu0 %805
        %807 = vrot.lane.b32.xlu0 %v733, 48
        %v808 = vpop.permute.xlu0 %807
        %809 = vrot.lane.b32.xlu0 %v735, 48
        %v810 = vpop.permute.xlu0 %809
        %811 = vrot.lane.b32.xlu0 %v737, 48
        %v812 = vpop.permute.xlu0 %811
        %813 = vrot.lane.b32.xlu0 %v739, 48
        %v814 = vpop.permute.xlu0 %813
        %815 = vrot.lane.b32.xlu0 %v741, 48
        %v816 = vpop.permute.xlu0 %815
        %817 = vrot.lane.b32.xlu0 %v743, 48
        %v818 = vpop.permute.xlu0 %817
        %819 = vrot.lane.b32.xlu0 %v745, 48
        %v820 = vpop.permute.xlu0 %819
        %821 = vrot.lane.b32.xlu0 %v747, 48
        %v822 = vpop.permute.xlu0 %821
        %823 = vrot.lane.b32.xlu0 %v749, 48
        %v824 = vpop.permute.xlu0 %823
        %825 = vrot.lane.b32.xlu0 %v751, 48
        %v826 = vpop.permute.xlu0 %825
        %827 = vrot.lane.b32.xlu0 %v753, 48
        %v828 = vpop.permute.xlu0 %827
        %829 = vrot.lane.b32.xlu0 %v755, 48
        %v830 = vpop.permute.xlu0 %829
        %831 = vrot.lane.b32.xlu0 %v796, 48
        %v832 = vpop.permute.xlu0 %831
        %833 = vrot.lane.b32.xlu0 %v795, 48
        %v834 = vpop.permute.xlu0 %833
        %vm835 = vsmask.f32 5376
        %v836 = vrot.slane %v294, 2
        %v837 = vrot.slane %v290, 3
        %v838 = vor.u32 %v836, %v837
        %v839 = vrot.slane %v302, 2
        %v840 = vrot.slane %v298, 3
        %v841 = vor.u32 %v839, %v840
        %v842 = vsel %vm835, %v838, %v841
        %v843 = vrot.slane %v310, 2
        %v844 = vrot.slane %v306, 3
        %v845 = vor.u32 %v843, %v844
        %v846 = vsel %vm835, %v841, %v845
        %v847 = vrot.slane %v318, 2
        %v848 = vrot.slane %v314, 3
        %v849 = vor.u32 %v847, %v848
        %v850 = vsel %vm835, %v845, %v849
        %v851 = vrot.slane %v326, 2
        %v852 = vrot.slane %v322, 3
        %v853 = vor.u32 %v851, %v852
        %v854 = vsel %vm835, %v849, %v853
        %v855 = vrot.slane %v334, 2
        %v856 = vrot.slane %v330, 3
        %v857 = vor.u32 %v855, %v856
        %v858 = vsel %vm835, %v853, %v857
        %v859 = vrot.slane %v342, 2
        %v860 = vrot.slane %v338, 3
        %v861 = vor.u32 %v859, %v860
        %v862 = vsel %vm835, %v857, %v861
        %v863 = vrot.slane %v350, 2
        %v864 = vrot.slane %v346, 3
        %v865 = vor.u32 %v863, %v864
        %v866 = vsel %vm835, %v861, %v865
        %v867 = vrot.slane %v358, 2
        %v868 = vrot.slane %v354, 3
        %v869 = vor.u32 %v867, %v868
        %v870 = vsel %vm835, %v865, %v869
        %v871 = vrot.slane %v366, 2
        %v872 = vrot.slane %v362, 3
        %v873 = vor.u32 %v871, %v872
        %v874 = vsel %vm835, %v869, %v873
        %v875 = vrot.slane %v374, 2
        %v876 = vrot.slane %v370, 3
        %v877 = vor.u32 %v875, %v876
        %v878 = vsel %vm835, %v873, %v877
        %v879 = vrot.slane %v382, 2
        %v880 = vrot.slane %v378, 3
        %v881 = vor.u32 %v879, %v880
        %v882 = vsel %vm835, %v877, %v881
        %v883 = vrot.slane %v390, 2
        %v884 = vrot.slane %v386, 3
        %v885 = vor.u32 %v883, %v884
        %v886 = vsel %vm835, %v881, %v885
        %v887 = vrot.slane %v398, 2
        %v888 = vrot.slane %v394, 3
        %v889 = vor.u32 %v887, %v888
        %v890 = vsel %vm835, %v885, %v889
        %v891 = vrot.slane %v406, 2
        %v892 = vrot.slane %v402, 3
        %v893 = vor.u32 %v891, %v892
        %v894 = vsel %vm835, %v889, %v893
        %v895 = vrot.slane %v414, 2
        %v896 = vrot.slane %v410, 3
        %v897 = vor.u32 %v895, %v896
        %v898 = vsel %vm835, %v893, %v897
        %v899 = vrot.slane %v422, 2
        %v900 = vrot.slane %v418, 3
        %v901 = vor.u32 %v899, %v900
        %v902 = vsel %vm835, %v897, %v901
        %v903 = vrot.slane %v672, 2
        %v904 = vrot.slane %v675, 3
        %v905 = vor.u32 %v903, %v904
        %v906 = vsel %vm835, %v901, %v905
        %v908 = vshrl.u32 %v272, 16
        %v910 = vrot.slane %v908, 2
        %v911 = vshll.u32 %v272, 16
        %v913 = vrot.slane %v911, 3
        %v914 = vor.u32 %v910, %v913
        %v915 = vsel %vm835, %v905, %v914
        %916 = vrot.lane.b32.xlu0 %v842, 56
        %v917 = vpop.permute.xlu0 %916
        %918 = vrot.lane.b32.xlu0 %v846, 56
        %v919 = vpop.permute.xlu0 %918
        %920 = vrot.lane.b32.xlu0 %v850, 56
        %v921 = vpop.permute.xlu0 %920
        %922 = vrot.lane.b32.xlu0 %v854, 56
        %v923 = vpop.permute.xlu0 %922
        %924 = vrot.lane.b32.xlu0 %v858, 56
        %v925 = vpop.permute.xlu0 %924
        %926 = vrot.lane.b32.xlu0 %v862, 56
        %v927 = vpop.permute.xlu0 %926
        %928 = vrot.lane.b32.xlu0 %v866, 56
        %v929 = vpop.permute.xlu0 %928
        %930 = vrot.lane.b32.xlu0 %v870, 56
        %v931 = vpop.permute.xlu0 %930
        %932 = vrot.lane.b32.xlu0 %v874, 56
        %v933 = vpop.permute.xlu0 %932
        %934 = vrot.lane.b32.xlu0 %v878, 56
        %v935 = vpop.permute.xlu0 %934
        %936 = vrot.lane.b32.xlu0 %v882, 56
        %v937 = vpop.permute.xlu0 %936
        %938 = vrot.lane.b32.xlu0 %v886, 56
        %v939 = vpop.permute.xlu0 %938
        %940 = vrot.lane.b32.xlu0 %v890, 56
        %v941 = vpop.permute.xlu0 %940
        %942 = vrot.lane.b32.xlu0 %v894, 56
        %v943 = vpop.permute.xlu0 %942
        %944 = vrot.lane.b32.xlu0 %v898, 56
        %v945 = vpop.permute.xlu0 %944
        %946 = vrot.lane.b32.xlu0 %v902, 56
        %v947 = vpop.permute.xlu0 %946
        %948 = vrot.lane.b32.xlu0 %v906, 56
        %v949 = vpop.permute.xlu0 %948
        %950 = vrot.lane.b32.xlu0 %v915, 56
        %v951 = vpop.permute.xlu0 %950
        %952 = vrot.lane.b32.xlu0 %v914, 56
        %v953 = vpop.permute.xlu0 %952
        %vm954 = vcmask 1044480
        %v955 = vrot.slane %v254, 3
        %v956 = vrot.slane %v255, 3
        %v957 = vsel %vm954, %v955, %v956
        %v958 = vrot.slane %v256, 3
        %v959 = vsel %vm954, %v956, %v958
        %v960 = vrot.slane %v257, 3
        %v961 = vsel %vm954, %v958, %v960
        %v962 = vrot.slane %v258, 3
        %v963 = vsel %vm954, %v960, %v962
        %v964 = vrot.slane %v259, 3
        %v965 = vsel %vm954, %v962, %v964
        %v966 = vrot.slane %v260, 3
        %v967 = vsel %vm954, %v964, %v966
        %v968 = vrot.slane %v261, 3
        %v969 = vsel %vm954, %v966, %v968
        %v970 = vrot.slane %v262, 3
        %v971 = vsel %vm954, %v968, %v970
        %v972 = vrot.slane %v263, 3
        %v973 = vsel %vm954, %v970, %v972
        %v974 = vrot.slane %v264, 3
        %v975 = vsel %vm954, %v972, %v974
        %v976 = vrot.slane %v265, 3
        %v977 = vsel %vm954, %v974, %v976
        %v978 = vrot.slane %v266, 3
        %v979 = vsel %vm954, %v976, %v978
        %v980 = vrot.slane %v267, 3
        %v981 = vsel %vm954, %v978, %v980
        %v982 = vrot.slane %v268, 3
        %v983 = vsel %vm954, %v980, %v982
        %v984 = vrot.slane %v269, 3
        %v985 = vsel %vm954, %v982, %v984
        %v986 = vrot.slane %v270, 3
        %v987 = vsel %vm954, %v984, %v986
        %v988 = vrot.slane %v271, 3
        %v989 = vsel %vm954, %v986, %v988
        %v990 = vrot.slane %v272, 3
        %v991 = vsel %vm954, %v988, %v990
        %992 = vrot.lane.b32.xlu0 %v957, 64
        %v993 = vpop.permute.xlu0 %992
        %994 = vrot.lane.b32.xlu0 %v959, 64
        %v995 = vpop.permute.xlu0 %994
        %996 = vrot.lane.b32.xlu0 %v961, 64
        %v997 = vpop.permute.xlu0 %996
        %998 = vrot.lane.b32.xlu0 %v963, 64
        %v999 = vpop.permute.xlu0 %998
        %1000 = vrot.lane.b32.xlu0 %v965, 64
        %v1001 = vpop.permute.xlu0 %1000
        %1002 = vrot.lane.b32.xlu0 %v967, 64
        %v1003 = vpop.permute.xlu0 %1002
        %1004 = vrot.lane.b32.xlu0 %v969, 64
        %v1005 = vpop.permute.xlu0 %1004
        %1006 = vrot.lane.b32.xlu0 %v971, 64
        %v1007 = vpop.permute.xlu0 %1006
        %1008 = vrot.lane.b32.xlu0 %v973, 64
        %v1009 = vpop.permute.xlu0 %1008
        %1010 = vrot.lane.b32.xlu0 %v975, 64
        %v1011 = vpop.permute.xlu0 %1010
        %1012 = vrot.lane.b32.xlu0 %v977, 64
        %v1013 = vpop.permute.xlu0 %1012
        %1014 = vrot.lane.b32.xlu0 %v979, 64
        %v1015 = vpop.permute.xlu0 %1014
        %1016 = vrot.lane.b32.xlu0 %v981, 64
        %v1017 = vpop.permute.xlu0 %1016
        %1018 = vrot.lane.b32.xlu0 %v983, 64
        %v1019 = vpop.permute.xlu0 %1018
        %1020 = vrot.lane.b32.xlu0 %v985, 64
        %v1021 = vpop.permute.xlu0 %1020
        %1022 = vrot.lane.b32.xlu0 %v987, 64
        %v1023 = vpop.permute.xlu0 %1022
        %1024 = vrot.lane.b32.xlu0 %v989, 64
        %v1025 = vpop.permute.xlu0 %1024
        %1026 = vrot.lane.b32.xlu0 %v991, 64
        %v1027 = vpop.permute.xlu0 %1026
        %1028 = vrot.lane.b32.xlu0 %v990, 64
        %v1029 = vpop.permute.xlu0 %1028
        %vm1030 = vcmask 64512
        %v1032 = vsel %vm1030, %v252, %v426
        %v1034 = vsel %vm1030, %v253, %v428
        %v1036 = vsel %vm1030, %v254, %v430
        %v1038 = vsel %vm1030, %v255, %v432
        %v1040 = vsel %vm1030, %v256, %v434
        %v1042 = vsel %vm1030, %v257, %v436
        %v1044 = vsel %vm1030, %v258, %v438
        %v1046 = vsel %vm1030, %v259, %v440
        %v1048 = vsel %vm1030, %v260, %v442
        %v1050 = vsel %vm1030, %v261, %v444
        %v1052 = vsel %vm1030, %v262, %v446
        %v1054 = vsel %vm1030, %v263, %v448
        %v1056 = vsel %vm1030, %v264, %v450
        %v1058 = vsel %vm1030, %v265, %v452
        %v1060 = vsel %vm1030, %v266, %v454
        %v1062 = vsel %vm1030, %v267, %v456
        %v1064 = vsel %vm1030, %v268, %v458
        %v1066 = vsel %vm1030, %v269, %v460
        %v1068 = vsel %vm1030, %v270, %v462
        %vm1069 = vcmask 130048
        %v1071 = vsel %vm1069, %v1032, %v521
        %v1073 = vsel %vm1069, %v1034, %v523
        %v1075 = vsel %vm1069, %v1036, %v525
        %v1077 = vsel %vm1069, %v1038, %v527
        %v1079 = vsel %vm1069, %v1040, %v529
        %v1081 = vsel %vm1069, %v1042, %v531
        %v1083 = vsel %vm1069, %v1044, %v533
        %v1085 = vsel %vm1069, %v1046, %v535
        %v1087 = vsel %vm1069, %v1048, %v537
        %v1089 = vsel %vm1069, %v1050, %v539
        %v1091 = vsel %vm1069, %v1052, %v541
        %v1093 = vsel %vm1069, %v1054, %v543
        %v1095 = vsel %vm1069, %v1056, %v545
        %v1097 = vsel %vm1069, %v1058, %v547
        %v1099 = vsel %vm1069, %v1060, %v549
        %v1101 = vsel %vm1069, %v1062, %v551
        %v1103 = vsel %vm1069, %v1064, %v553
        %v1105 = vsel %vm1069, %v1066, %v555
        %v1107 = vsel %vm1069, %v1068, %v557
        %vm1108 = vcmask 195584
        %v1110 = vsel %vm1108, %v1071, %v562
        %v1112 = vsel %vm1108, %v1073, %v564
        %v1114 = vsel %vm1108, %v1075, %v566
        %v1116 = vsel %vm1108, %v1077, %v568
        %v1118 = vsel %vm1108, %v1079, %v570
        %v1120 = vsel %vm1108, %v1081, %v572
        %v1122 = vsel %vm1108, %v1083, %v574
        %v1124 = vsel %vm1108, %v1085, %v576
        %v1126 = vsel %vm1108, %v1087, %v578
        %v1128 = vsel %vm1108, %v1089, %v580
        %v1130 = vsel %vm1108, %v1091, %v582
        %v1132 = vsel %vm1108, %v1093, %v584
        %v1134 = vsel %vm1108, %v1095, %v586
        %v1136 = vsel %vm1108, %v1097, %v588
        %v1138 = vsel %vm1108, %v1099, %v590
        %v1140 = vsel %vm1108, %v1101, %v592
        %v1142 = vsel %vm1108, %v1103, %v594
        %v1144 = vsel %vm1108, %v1105, %v596
        %v1146 = vsel %vm1108, %v1107, %v598
        %vm1147 = vcmask 261120
        %v1149 = vsel %vm1147, %v1110, %v681
        %v1151 = vsel %vm1147, %v1112, %v683
        %v1153 = vsel %vm1147, %v1114, %v685
        %v1155 = vsel %vm1147, %v1116, %v687
        %v1157 = vsel %vm1147, %v1118, %v689
        %v1159 = vsel %vm1147, %v1120, %v691
        %v1161 = vsel %vm1147, %v1122, %v693
        %v1163 = vsel %vm1147, %v1124, %v695
        %v1165 = vsel %vm1147, %v1126, %v697
        %v1167 = vsel %vm1147, %v1128, %v699
        %v1169 = vsel %vm1147, %v1130, %v701
        %v1171 = vsel %vm1147, %v1132, %v703
        %v1173 = vsel %vm1147, %v1134, %v705
        %v1175 = vsel %vm1147, %v1136, %v707
        %v1177 = vsel %vm1147, %v1138, %v709
        %v1179 = vsel %vm1147, %v1140, %v711
        %v1181 = vsel %vm1147, %v1142, %v713
        %v1183 = vsel %vm1147, %v1144, %v715
        %v1185 = vsel %vm1147, %v1146, %v717
        %vm1186 = vcmask 326656
        %v1188 = vsel %vm1186, %v1149, %v757
        %v1190 = vsel %vm1186, %v1151, %v759
        %v1192 = vsel %vm1186, %v1153, %v761
        %v1194 = vsel %vm1186, %v1155, %v763
        %v1196 = vsel %vm1186, %v1157, %v765
        %v1198 = vsel %vm1186, %v1159, %v767
        %v1200 = vsel %vm1186, %v1161, %v769
        %v1202 = vsel %vm1186, %v1163, %v771
        %v1204 = vsel %vm1186, %v1165, %v773
        %v1206 = vsel %vm1186, %v1167, %v775
        %v1208 = vsel %vm1186, %v1169, %v777
        %v1210 = vsel %vm1186, %v1171, %v779
        %v1212 = vsel %vm1186, %v1173, %v781
        %v1214 = vsel %vm1186, %v1175, %v783
        %v1216 = vsel %vm1186, %v1177, %v785
        %v1218 = vsel %vm1186, %v1179, %v787
        %v1220 = vsel %vm1186, %v1181, %v789
        %v1222 = vsel %vm1186, %v1183, %v791
        %v1224 = vsel %vm1186, %v1185, %v793
        %vm1225 = vcmask 392192
        %v1227 = vsel %vm1225, %v1188, %v798
        %v1229 = vsel %vm1225, %v1190, %v800
        %v1231 = vsel %vm1225, %v1192, %v802
        %v1233 = vsel %vm1225, %v1194, %v804
        %v1235 = vsel %vm1225, %v1196, %v806
        %v1237 = vsel %vm1225, %v1198, %v808
        %v1239 = vsel %vm1225, %v1200, %v810
        %v1241 = vsel %vm1225, %v1202, %v812
        %v1243 = vsel %vm1225, %v1204, %v814
        %v1245 = vsel %vm1225, %v1206, %v816
        %v1247 = vsel %vm1225, %v1208, %v818
        %v1249 = vsel %vm1225, %v1210, %v820
        %v1251 = vsel %vm1225, %v1212, %v822
        %v1253 = vsel %vm1225, %v1214, %v824
        %v1255 = vsel %vm1225, %v1216, %v826
        %v1257 = vsel %vm1225, %v1218, %v828
        %v1259 = vsel %vm1225, %v1220, %v830
        %v1261 = vsel %vm1225, %v1222, %v832
        %v1263 = vsel %vm1225, %v1224, %v834
        %vm1264 = vcmask 457728
        %v1266 = vsel %vm1264, %v1227, %v917
        %v1268 = vsel %vm1264, %v1229, %v919
        %v1270 = vsel %vm1264, %v1231, %v921
        %v1272 = vsel %vm1264, %v1233, %v923
        %v1274 = vsel %vm1264, %v1235, %v925
        %v1276 = vsel %vm1264, %v1237, %v927
        %v1278 = vsel %vm1264, %v1239, %v929
        %v1280 = vsel %vm1264, %v1241, %v931
        %v1282 = vsel %vm1264, %v1243, %v933
        %v1284 = vsel %vm1264, %v1245, %v935
        %v1286 = vsel %vm1264, %v1247, %v937
        %v1288 = vsel %vm1264, %v1249, %v939
        %v1290 = vsel %vm1264, %v1251, %v941
        %v1292 = vsel %vm1264, %v1253, %v943
        %v1294 = vsel %vm1264, %v1255, %v945
        %v1296 = vsel %vm1264, %v1257, %v947
        %v1298 = vsel %vm1264, %v1259, %v949
        %v1300 = vsel %vm1264, %v1261, %v951
        %v1302 = vsel %vm1264, %v1263, %v953
        %vm1303 = vcmask 523264
        %v1305 = vsel %vm1303, %v1266, %v993
        %v1307 = vsel %vm1303, %v1268, %v995
        %v1309 = vsel %vm1303, %v1270, %v997
        %v1311 = vsel %vm1303, %v1272, %v999
        %v1313 = vsel %vm1303, %v1274, %v1001
        %v1315 = vsel %vm1303, %v1276, %v1003
        %v1317 = vsel %vm1303, %v1278, %v1005
        %v1319 = vsel %vm1303, %v1280, %v1007
        %v1321 = vsel %vm1303, %v1282, %v1009
        %v1323 = vsel %vm1303, %v1284, %v1011
        %v1325 = vsel %vm1303, %v1286, %v1013
        %v1327 = vsel %vm1303, %v1288, %v1015
        %v1329 = vsel %vm1303, %v1290, %v1017
        %v1331 = vsel %vm1303, %v1292, %v1019
        %v1333 = vsel %vm1303, %v1294, %v1021
        %v1335 = vsel %vm1303, %v1296, %v1023
        %v1337 = vsel %vm1303, %v1298, %v1025
        %v1339 = vsel %vm1303, %v1300, %v1027
        %v1341 = vsel %vm1303, %v1302, %v1029
        %v1342 = vld [vmem:[%s1] sm:$0xf]
        %v1343 = vld [vmem:[%s1 + $0x4] sm:$0xf]
        %v1344 = vld [vmem:[%s1 + $0x8] sm:$0xf]
        %v1345 = vld [vmem:[%s1 + $0xc] sm:$0xf]
        %v1346 = vld [vmem:[%s1 + $0x10] sm:$0xf]
        %v1347 = vld [vmem:[%s1 + $0x14] sm:$0xf]
        %v1348 = vld [vmem:[%s1 + $0x18] sm:$0xf]
        %v1349 = vld [vmem:[%s1 + $0x1c] sm:$0xf]
        %v1350 = vld [vmem:[%s1 + $0x20] sm:$0xf]
        %vm1351 = vsmask.f32 4352
        %v1352 = vshrl.u32 %v1305, 16
        %v1354 = vrot.slane %v1352, 3
        %v1355 = vshll.u32 %v1305, 16
        %v1357 = vrot.slane %v1355, 4
        %v1358 = vor.u32 %v1354, %v1357
        %v1359 = vshrl.u32 %v1307, 16
        %v1361 = vrot.slane %v1359, 3
        %v1362 = vshll.u32 %v1307, 16
        %v1364 = vrot.slane %v1362, 4
        %v1365 = vor.u32 %v1361, %v1364
        %v1366 = vsel %vm1351, %v1358, %v1365
        %v1367 = vshrl.u32 %v1309, 16
        %v1369 = vrot.slane %v1367, 3
        %v1370 = vshll.u32 %v1309, 16
        %v1372 = vrot.slane %v1370, 4
        %v1373 = vor.u32 %v1369, %v1372
        %v1374 = vsel %vm1351, %v1365, %v1373
        %v1375 = vshrl.u32 %v1311, 16
        %v1377 = vrot.slane %v1375, 3
        %v1378 = vshll.u32 %v1311, 16
        %v1380 = vrot.slane %v1378, 4
        %v1381 = vor.u32 %v1377, %v1380
        %v1382 = vsel %vm1351, %v1373, %v1381
        %v1383 = vshrl.u32 %v1313, 16
        %v1385 = vrot.slane %v1383, 3
        %v1386 = vshll.u32 %v1313, 16
        %v1388 = vrot.slane %v1386, 4
        %v1389 = vor.u32 %v1385, %v1388
        %v1390 = vsel %vm1351, %v1381, %v1389
        %v1391 = vshrl.u32 %v1315, 16
        %v1393 = vrot.slane %v1391, 3
        %v1394 = vshll.u32 %v1315, 16
        %v1396 = vrot.slane %v1394, 4
        %v1397 = vor.u32 %v1393, %v1396
        %v1398 = vsel %vm1351, %v1389, %v1397
        %v1399 = vshrl.u32 %v1317, 16
        %v1401 = vrot.slane %v1399, 3
        %v1402 = vshll.u32 %v1317, 16
        %v1404 = vrot.slane %v1402, 4
        %v1405 = vor.u32 %v1401, %v1404
        %v1406 = vsel %vm1351, %v1397, %v1405
        %v1407 = vshrl.u32 %v1319, 16
        %v1409 = vrot.slane %v1407, 3
        %v1410 = vshll.u32 %v1319, 16
        %v1412 = vrot.slane %v1410, 4
        %v1413 = vor.u32 %v1409, %v1412
        %v1414 = vsel %vm1351, %v1405, %v1413
        %v1415 = vshrl.u32 %v1321, 16
        %v1417 = vrot.slane %v1415, 3
        %v1418 = vshll.u32 %v1321, 16
        %v1420 = vrot.slane %v1418, 4
        %v1421 = vor.u32 %v1417, %v1420
        %v1422 = vsel %vm1351, %v1413, %v1421
        %v1423 = vshrl.u32 %v1323, 16
        %v1425 = vrot.slane %v1423, 3
        %v1426 = vshll.u32 %v1323, 16
        %v1428 = vrot.slane %v1426, 4
        %v1429 = vor.u32 %v1425, %v1428
        %v1430 = vsel %vm1351, %v1421, %v1429
        %v1431 = vshrl.u32 %v1325, 16
        %v1433 = vrot.slane %v1431, 3
        %v1434 = vshll.u32 %v1325, 16
        %v1436 = vrot.slane %v1434, 4
        %v1437 = vor.u32 %v1433, %v1436
        %v1438 = vsel %vm1351, %v1429, %v1437
        %v1439 = vshrl.u32 %v1327, 16
        %v1441 = vrot.slane %v1439, 3
        %v1442 = vshll.u32 %v1327, 16
        %v1444 = vrot.slane %v1442, 4
        %v1445 = vor.u32 %v1441, %v1444
        %v1446 = vsel %vm1351, %v1437, %v1445
        %v1447 = vshrl.u32 %v1329, 16
        %v1449 = vrot.slane %v1447, 3
        %v1450 = vshll.u32 %v1329, 16
        %v1452 = vrot.slane %v1450, 4
        %v1453 = vor.u32 %v1449, %v1452
        %v1454 = vsel %vm1351, %v1445, %v1453
        %v1455 = vshrl.u32 %v1331, 16
        %v1457 = vrot.slane %v1455, 3
        %v1458 = vshll.u32 %v1331, 16
        %v1460 = vrot.slane %v1458, 4
        %v1461 = vor.u32 %v1457, %v1460
        %v1462 = vsel %vm1351, %v1453, %v1461
        %v1463 = vshrl.u32 %v1333, 16
        %v1465 = vrot.slane %v1463, 3
        %v1466 = vshll.u32 %v1333, 16
        %v1468 = vrot.slane %v1466, 4
        %v1469 = vor.u32 %v1465, %v1468
        %v1470 = vsel %vm1351, %v1461, %v1469
        %v1471 = vshrl.u32 %v1335, 16
        %v1473 = vrot.slane %v1471, 3
        %v1474 = vshll.u32 %v1335, 16
        %v1476 = vrot.slane %v1474, 4
        %v1477 = vor.u32 %v1473, %v1476
        %v1478 = vsel %vm1351, %v1469, %v1477
        %v1479 = vshrl.u32 %v1337, 16
        %v1481 = vrot.slane %v1479, 3
        %v1482 = vshll.u32 %v1337, 16
        %v1484 = vrot.slane %v1482, 4
        %v1485 = vor.u32 %v1481, %v1484
        %v1486 = vsel %vm1351, %v1477, %v1485
        %v1487 = vshrl.u32 %v1339, 16
        %v1489 = vrot.slane %v1487, 3
        %v1490 = vshll.u32 %v1339, 16
        %v1492 = vrot.slane %v1490, 4
        %v1493 = vor.u32 %v1489, %v1492
        %v1494 = vsel %vm1351, %v1485, %v1493
        %v1495 = vshrl.u32 %v1341, 16
        %v1497 = vrot.slane %v1495, 3
        %v1498 = vshll.u32 %v1341, 16
        %v1500 = vrot.slane %v1498, 4
        %v1501 = vor.u32 %v1497, %v1500
        %v1502 = vsel %vm1351, %v1493, %v1501
        %v1512 = vunpack.c.l.b16 %v1342
        %v1513 = vunpack.c.l.b16 %v1343
        %v1514 = vunpack.c.l.b16 %v1344
        %v1515 = vunpack.c.l.b16 %v1345
        %v1516 = vunpack.c.l.b16 %v1346
        %v1517 = vunpack.c.l.b16 %v1347
        %v1518 = vunpack.c.l.b16 %v1348
        %v1519 = vunpack.c.l.b16 %v1349
        %v1520 = vunpack.c.l.b16 %v1350
        %v1521 = vpack.c.b16 %v1513, %v1512
        %v1522 = vpack.c.b16 %v1515, %v1514
        %v1523 = vpack.c.b16 %v1517, %v1516
        %v1524 = vpack.c.b16 %v1519, %v1518
        %v1525 = vpack.c.b16 %v1520, %v1520
        %vm1530 = vcmask 588800
        %v1532 = vsel %vm1530, %v1366, 0
        %v1535 = vsel %vm1530, %v1374, 0
        %v1538 = vsel %vm1530, %v1382, 0
        %v1541 = vsel %vm1530, %v1390, 0
        %v1544 = vsel %vm1530, %v1398, 0
        %v1547 = vsel %vm1530, %v1406, 0
        %v1550 = vsel %vm1530, %v1414, 0
        %v1553 = vsel %vm1530, %v1422, 0
        %v1556 = vsel %vm1530, %v1430, 0
        %v1559 = vsel %vm1530, %v1438, 0
        %v1562 = vsel %vm1530, %v1446, 0
        %v1565 = vsel %vm1530, %v1454, 0
        %v1568 = vsel %vm1530, %v1462, 0
        %v1571 = vsel %vm1530, %v1470, 0
        %v1574 = vsel %vm1530, %v1478, 0
        %v1577 = vsel %vm1530, %v1486, 0
        %v1580 = vsel %vm1530, %v1494, 0
        %v1583 = vsel %vm1530, %v1502, 0
        %vm1585 = vcmask 1043456
        %v1587 = vsel %vm1585, %v1525, 0
        %1589 = vmatprep.subr.bf16.mxu0 0
        %1590 = vmatpush1.bf16.msra.mxu0 %v1521
        %1591 = vmatprep.subr.bf16.mxu0 0
        %1592 = vmatpush1.bf16.msra.mxu0 %v1522
        %1593 = vmatprep.subr.bf16.mxu0 0
        %1594 = vmatpush1.bf16.msra.mxu0 %v1523
        %1595 = vmatprep.subr.bf16.mxu0 0
        %1596 = vmatpush1.bf16.msra.mxu0 %v1524
        %1597 = vmatprep.subr.bf16.mxu0 0
        %1598 = vmatpush1.bf16.msra.mxu0 %v1587
        %1599 = vmatprep.subr.bf16.mxu0 0
        %1600 = vmatpush1.bf16.msra.mxu0 0
        %1601 = vmatprep.subr.bf16.mxu0 0
        %1602 = vmatpush1.bf16.msra.mxu0 0
        %1603 = vmatprep.subr.bf16.mxu0 0
        %1604 = vmatpush1.bf16.msra.mxu0 0
        %1605 = vmatprep.subr.bf16.mxu0 0
        %1606 = vmatpush1.bf16.msra.mxu0 0
        %1607 = vmatprep.subr.bf16.mxu0 0
        %1608 = vmatpush1.bf16.msra.mxu0 0
        %1609 = vmatprep.subr.bf16.mxu0 0
        %1610 = vmatpush1.bf16.msra.mxu0 0
        %1611 = vmatprep.subr.bf16.mxu0 0
        %1612 = vmatpush1.bf16.msra.mxu0 0
        %1613 = vmatprep.subr.bf16.mxu0 0
        %1614 = vmatpush1.bf16.msra.mxu0 0
        %1615 = vmatprep.subr.bf16.mxu0 0
        %1616 = vmatpush1.bf16.msra.mxu0 0
        %1617 = vmatprep.subr.bf16.mxu0 0
        %1618 = vmatpush1.bf16.msra.mxu0 0
        %1619 = vmatprep.subr.bf16.mxu0 0
        %1620 = vmatpush1.bf16.msra.mxu0 0
        %1621 = vmatprep.mubr.bf16.mxu0 0
        %1622 = vmatmul.mubr.bf16.gmra.mrb[0].mxu0 %v1532
        %v1623 = vpop.f32.mrb[0].mxu0
        %v1624 = vadd.f32 0.0, %v1623
        %v1625 = vpop.f32.mrb[0].mxu0
        %v1626 = vpop.f32.mrb[0].mxu0
        %v1627 = vadd.f32 0.0, %v1626
        %v1628 = vpop.f32.mrb[0].mxu0
        %1629 = vmatprep.mubr.bf16.mxu0 0
        %1630 = vmatmul.mubr.bf16.gmra.mrb[0].mxu0 %v1535
        %v1631 = vpop.f32.mrb[0].mxu0
        %v1632 = vadd.f32 0.0, %v1631
        %v1633 = vpop.f32.mrb[0].mxu0
        %v1634 = vpop.f32.mrb[0].mxu0
        %v1635 = vadd.f32 0.0, %v1634
        %v1636 = vpop.f32.mrb[0].mxu0
        %1637 = vmatprep.mubr.bf16.mxu0 0
        %1638 = vmatmul.mubr.bf16.gmra.mrb[0].mxu0 %v1538
        %v1639 = vpop.f32.mrb[0].mxu0
        %v1640 = vadd.f32 0.0, %v1639
        %v1641 = vpop.f32.mrb[0].mxu0
        %v1642 = vpop.f32.mrb[0].mxu0
        %v1643 = vadd.f32 0.0, %v1642
        %v1644 = vpop.f32.mrb[0].mxu0
        %1645 = vmatprep.mubr.bf16.mxu0 0
        %1646 = vmatmul.mubr.bf16.gmra.mrb[0].mxu0 %v1541
        %v1647 = vpop.f32.mrb[0].mxu0
        %v1648 = vadd.f32 0.0, %v1647
        %v1649 = vpop.f32.mrb[0].mxu0
        %v1650 = vpop.f32.mrb[0].mxu0
        %v1651 = vadd.f32 0.0, %v1650
        %v1652 = vpop.f32.mrb[0].mxu0
        %1653 = vmatprep.mubr.bf16.mxu0 0
        %1654 = vmatmul.mubr.bf16.gmra.mrb[0].mxu0 %v1544
        %v1655 = vpop.f32.mrb[0].mxu0
        %v1656 = vadd.f32 0.0, %v1655
        %v1657 = vpop.f32.mrb[0].mxu0
        %v1658 = vpop.f32.mrb[0].mxu0
        %v1659 = vadd.f32 0.0, %v1658
        %v1660 = vpop.f32.mrb[0].mxu0
        %1661 = vmatprep.mubr.bf16.mxu0 0
        %1662 = vmatmul.mubr.bf16.gmra.mrb[0].mxu0 %v1547
        %v1663 = vpop.f32.mrb[0].mxu0
        %v1664 = vadd.f32 0.0, %v1663
        %v1665 = vpop.f32.mrb[0].mxu0
        %v1666 = vpop.f32.mrb[0].mxu0
        %v1667 = vadd.f32 0.0, %v1666
        %v1668 = vpop.f32.mrb[0].mxu0
        %1669 = vmatprep.mubr.bf16.mxu0 0
        %1670 = vmatmul.mubr.bf16.gmra.mrb[0].mxu0 %v1550
        %v1671 = vpop.f32.mrb[0].mxu0
        %v1672 = vadd.f32 0.0, %v1671
        %v1673 = vpop.f32.mrb[0].mxu0
        %v1674 = vpop.f32.mrb[0].mxu0
        %v1675 = vadd.f32 0.0, %v1674
        %v1676 = vpop.f32.mrb[0].mxu0
        %1677 = vmatprep.mubr.bf16.mxu0 0
        %1678 = vmatmul.mubr.bf16.gmra.mrb[0].mxu0 %v1553
        %v1679 = vpop.f32.mrb[0].mxu0
        %v1680 = vadd.f32 0.0, %v1679
        %v1681 = vpop.f32.mrb[0].mxu0
        %v1682 = vpop.f32.mrb[0].mxu0
        %v1683 = vadd.f32 0.0, %v1682
        %v1684 = vpop.f32.mrb[0].mxu0
        %1685 = vmatprep.mubr.bf16.mxu0 0
        %1686 = vmatmul.mubr.bf16.gmra.mrb[0].mxu0 %v1556
        %v1687 = vpop.f32.mrb[0].mxu0
        %v1688 = vadd.f32 0.0, %v1687
        %v1689 = vpop.f32.mrb[0].mxu0
        %v1690 = vpop.f32.mrb[0].mxu0
        %v1691 = vadd.f32 0.0, %v1690
        %v1692 = vpop.f32.mrb[0].mxu0
        %1693 = vmatprep.mubr.bf16.mxu0 0
        %1694 = vmatmul.mubr.bf16.gmra.mrb[0].mxu0 %v1559
        %v1695 = vpop.f32.mrb[0].mxu0
        %v1696 = vadd.f32 0.0, %v1695
        %v1697 = vpop.f32.mrb[0].mxu0
        %v1698 = vpop.f32.mrb[0].mxu0
        %v1699 = vadd.f32 0.0, %v1698
        %v1700 = vpop.f32.mrb[0].mxu0
        %1701 = vmatprep.mubr.bf16.mxu0 0
        %1702 = vmatmul.mubr.bf16.gmra.mrb[0].mxu0 %v1562
        %v1703 = vpop.f32.mrb[0].mxu0
        %v1704 = vadd.f32 0.0, %v1703
        %v1705 = vpop.f32.mrb[0].mxu0
        %v1706 = vpop.f32.mrb[0].mxu0
        %v1707 = vadd.f32 0.0, %v1706
        %v1708 = vpop.f32.mrb[0].mxu0
        %1709 = vmatprep.mubr.bf16.mxu0 0
        %1710 = vmatmul.mubr.bf16.gmra.mrb[0].mxu0 %v1565
        %v1711 = vpop.f32.mrb[0].mxu0
        %v1712 = vadd.f32 0.0, %v1711
        %v1713 = vpop.f32.mrb[0].mxu0
        %v1714 = vpop.f32.mrb[0].mxu0
        %v1715 = vadd.f32 0.0, %v1714
        %v1716 = vpop.f32.mrb[0].mxu0
        %1717 = vmatprep.mubr.bf16.mxu0 0
        %1718 = vmatmul.mubr.bf16.gmra.mrb[0].mxu0 %v1568
        %v1719 = vpop.f32.mrb[0].mxu0
        %v1720 = vadd.f32 0.0, %v1719
        %v1721 = vpop.f32.mrb[0].mxu0
        %v1722 = vpop.f32.mrb[0].mxu0
        %v1723 = vadd.f32 0.0, %v1722
        %v1724 = vpop.f32.mrb[0].mxu0
        %1725 = vmatprep.mubr.bf16.mxu0 0
        %1726 = vmatmul.mubr.bf16.gmra.mrb[0].mxu0 %v1571
        %v1727 = vpop.f32.mrb[0].mxu0
        %v1728 = vadd.f32 0.0, %v1727
        %v1729 = vpop.f32.mrb[0].mxu0
        %v1730 = vpop.f32.mrb[0].mxu0
        %v1731 = vadd.f32 0.0, %v1730
        %v1732 = vpop.f32.mrb[0].mxu0
        %1733 = vmatprep.mubr.bf16.mxu0 0
        %1734 = vmatmul.mubr.bf16.gmra.mrb[0].mxu0 %v1574
        %v1735 = vpop.f32.mrb[0].mxu0
        %v1736 = vadd.f32 0.0, %v1735
        %v1737 = vpop.f32.mrb[0].mxu0
        %v1738 = vpop.f32.mrb[0].mxu0
        %v1739 = vadd.f32 0.0, %v1738
        %v1740 = vpop.f32.mrb[0].mxu0
        %1741 = vmatprep.mubr.bf16.mxu0 0
        %1742 = vmatmul.mubr.bf16.gmra.mrb[0].mxu0 %v1577
        %v1743 = vpop.f32.mrb[0].mxu0
        %v1744 = vadd.f32 0.0, %v1743
        %v1745 = vpop.f32.mrb[0].mxu0
        %v1746 = vpop.f32.mrb[0].mxu0
        %v1747 = vadd.f32 0.0, %v1746
        %v1748 = vpop.f32.mrb[0].mxu0
        %1749 = vmatprep.mubr.bf16.mxu0 0
        %1750 = vmatmul.mubr.bf16.gmra.mrb[0].mxu0 %v1580
        %v1751 = vpop.f32.mrb[0].mxu0
        %v1752 = vadd.f32 0.0, %v1751
        %v1753 = vpop.f32.mrb[0].mxu0
        %v1754 = vpop.f32.mrb[0].mxu0
        %v1755 = vadd.f32 0.0, %v1754
        %v1756 = vpop.f32.mrb[0].mxu0
        %1757 = vmatprep.mubr.bf16.mxu0 0
        %1758 = vmatmul.mubr.bf16.gmra.mrb[0].mxu0 %v1583
        %v1759 = vpop.f32.mrb[0].mxu0
        %v1760 = vadd.f32 0.0, %v1759
        %v1761 = vpop.f32.mrb[0].mxu0
        %v1762 = vpop.f32.mrb[0].mxu0
        %v1763 = vadd.f32 0.0, %v1762
        %v1764 = vpop.f32.mrb[0].mxu0
        %1765 = vdwg.mxu0
        %v1766 = vld [vmem:[%s2] sm:$0xff]
        %v1767 = vld [vmem:[%s2 + $0x8] sm:$0xff]
        %v1768 = vld [vmem:[%s2 + $0x10] sm:$0xff]
        %v1769 = vld [vmem:[%s2 + $0x18] sm:$0xff]
        %v1770 = vld [vmem:[%s2 + $0x20] sm:$0xff]
        %v1771 = vld [vmem:[%s2 + $0x28] sm:$0xff]
        %v1772 = vld [vmem:[%s2 + $0x30] sm:$0xff]
        %v1773 = vld [vmem:[%s2 + $0x38] sm:$0xff]
        %v1774 = vld [vmem:[%s2 + $0x40] sm:$0xff]
        %v1775 = vld [vmem:[%s2 + $0x48] sm:$0xff]
        %v1776 = vld [vmem:[%s2 + $0x50] sm:$0xff]
        %v1777 = vld [vmem:[%s2 + $0x58] sm:$0xff]
        %v1778 = vld [vmem:[%s2 + $0x60] sm:$0xff]
        %v1779 = vld [vmem:[%s2 + $0x68] sm:$0xff]
        %v1780 = vld [vmem:[%s2 + $0x70] sm:$0xff]
        %v1781 = vld [vmem:[%s2 + $0x78] sm:$0xff]
        %v1782 = vld [vmem:[%s2 + $0x80] sm:$0xff]
        %v1783 = vld [vmem:[%s2 + $0x88] sm:$0xff]
        %v1784 = vld [vmem:[%s2 + $0x90] sm:$0xff]
        %v1785 = vld [vmem:[%s2 + $0x98] sm:$0xff]
        %v1786 = vld [vmem:[%s2 + $0xa0] sm:$0xff]
        %v1787 = vld [vmem:[%s2 + $0xa8] sm:$0xff]
        %v1788 = vld [vmem:[%s2 + $0xb0] sm:$0xff]
        %v1789 = vld [vmem:[%s2 + $0xb8] sm:$0xff]
        %v1790 = vld [vmem:[%s2 + $0xc0] sm:$0xff]
        %v1791 = vld [vmem:[%s2 + $0xc8] sm:$0xff]
        %v1792 = vld [vmem:[%s2 + $0xd0] sm:$0xff]
        %v1793 = vld [vmem:[%s2 + $0xd8] sm:$0xff]
        %v1794 = vld [vmem:[%s2 + $0xe0] sm:$0xff]
        %v1795 = vld [vmem:[%s2 + $0xe8] sm:$0xff]
        %v1796 = vld [vmem:[%s2 + $0xf0] sm:$0xff]
        %v1797 = vld [vmem:[%s2 + $0xf8] sm:$0xff]
        %v1798 = vld [vmem:[%s2 + $0x100] sm:$0xff]
        %v1799 = vld [vmem:[%s2 + $0x108] sm:$0xff]
        %v1800 = vld [vmem:[%s2 + $0x110] sm:$0xff]
        %v1801 = vld [vmem:[%s2 + $0x118] sm:$0xff]
        %1803 = vset.pattern.permute.xlu0 0
        %1804 = vperm.xlu0 %1803, %v1766
        %v1805 = vpop.permute.xlu0 %1804
        %1808 = vset.pattern.permute.xlu0 0
        %1809 = vperm.xlu0 %1808, %v1767
        %v1810 = vpop.permute.xlu0 %1809
        %1813 = vset.pattern.permute.xlu0 0
        %1814 = vperm.xlu0 %1813, %v1768
        %v1815 = vpop.permute.xlu0 %1814
        %1818 = vset.pattern.permute.xlu0 0
        %1819 = vperm.xlu0 %1818, %v1769
        %v1820 = vpop.permute.xlu0 %1819
        %1823 = vset.pattern.permute.xlu0 0
        %1824 = vperm.xlu0 %1823, %v1770
        %v1825 = vpop.permute.xlu0 %1824
        %1828 = vset.pattern.permute.xlu0 0
        %1829 = vperm.xlu0 %1828, %v1771
        %v1830 = vpop.permute.xlu0 %1829
        %1833 = vset.pattern.permute.xlu0 0
        %1834 = vperm.xlu0 %1833, %v1772
        %v1835 = vpop.permute.xlu0 %1834
        %1838 = vset.pattern.permute.xlu0 0
        %1839 = vperm.xlu0 %1838, %v1773
        %v1840 = vpop.permute.xlu0 %1839
        %1843 = vset.pattern.permute.xlu0 0
        %1844 = vperm.xlu0 %1843, %v1774
        %v1845 = vpop.permute.xlu0 %1844
        %1848 = vset.pattern.permute.xlu0 0
        %1849 = vperm.xlu0 %1848, %v1775
        %v1850 = vpop.permute.xlu0 %1849
        %1853 = vset.pattern.permute.xlu0 0
        %1854 = vperm.xlu0 %1853, %v1776
        %v1855 = vpop.permute.xlu0 %1854
        %1858 = vset.pattern.permute.xlu0 0
        %1859 = vperm.xlu0 %1858, %v1777
        %v1860 = vpop.permute.xlu0 %1859
        %1863 = vset.pattern.permute.xlu0 0
        %1864 = vperm.xlu0 %1863, %v1778
        %v1865 = vpop.permute.xlu0 %1864
        %1868 = vset.pattern.permute.xlu0 0
        %1869 = vperm.xlu0 %1868, %v1779
        %v1870 = vpop.permute.xlu0 %1869
        %1873 = vset.pattern.permute.xlu0 0
        %1874 = vperm.xlu0 %1873, %v1780
        %v1875 = vpop.permute.xlu0 %1874
        %1878 = vset.pattern.permute.xlu0 0
        %1879 = vperm.xlu0 %1878, %v1781
        %v1880 = vpop.permute.xlu0 %1879
        %1883 = vset.pattern.permute.xlu0 0
        %1884 = vperm.xlu0 %1883, %v1782
        %v1885 = vpop.permute.xlu0 %1884
        %1888 = vset.pattern.permute.xlu0 0
        %1889 = vperm.xlu0 %1888, %v1783
        %v1890 = vpop.permute.xlu0 %1889
        %1893 = vset.pattern.permute.xlu0 0
        %1894 = vperm.xlu0 %1893, %v1784
        %v1895 = vpop.permute.xlu0 %1894
        %1898 = vset.pattern.permute.xlu0 0
        %1899 = vperm.xlu0 %1898, %v1785
        %v1900 = vpop.permute.xlu0 %1899
        %1903 = vset.pattern.permute.xlu0 0
        %1904 = vperm.xlu0 %1903, %v1786
        %v1905 = vpop.permute.xlu0 %1904
        %1908 = vset.pattern.permute.xlu0 0
        %1909 = vperm.xlu0 %1908, %v1787
        %v1910 = vpop.permute.xlu0 %1909
        %1913 = vset.pattern.permute.xlu0 0
        %1914 = vperm.xlu0 %1913, %v1788
        %v1915 = vpop.permute.xlu0 %1914
        %1918 = vset.pattern.permute.xlu0 0
        %1919 = vperm.xlu0 %1918, %v1789
        %v1920 = vpop.permute.xlu0 %1919
        %1923 = vset.pattern.permute.xlu0 0
        %1924 = vperm.xlu0 %1923, %v1790
        %v1925 = vpop.permute.xlu0 %1924
        %1928 = vset.pattern.permute.xlu0 0
        %1929 = vperm.xlu0 %1928, %v1791
        %v1930 = vpop.permute.xlu0 %1929
        %1933 = vset.pattern.permute.xlu0 0
        %1934 = vperm.xlu0 %1933, %v1792
        %v1935 = vpop.permute.xlu0 %1934
        %1938 = vset.pattern.permute.xlu0 0
        %1939 = vperm.xlu0 %1938, %v1793
        %v1940 = vpop.permute.xlu0 %1939
        %1943 = vset.pattern.permute.xlu0 0
        %1944 = vperm.xlu0 %1943, %v1794
        %v1945 = vpop.permute.xlu0 %1944
        %1948 = vset.pattern.permute.xlu0 0
        %1949 = vperm.xlu0 %1948, %v1795
        %v1950 = vpop.permute.xlu0 %1949
        %1953 = vset.pattern.permute.xlu0 0
        %1954 = vperm.xlu0 %1953, %v1796
        %v1955 = vpop.permute.xlu0 %1954
        %1958 = vset.pattern.permute.xlu0 0
        %1959 = vperm.xlu0 %1958, %v1797
        %v1960 = vpop.permute.xlu0 %1959
        %1963 = vset.pattern.permute.xlu0 0
        %1964 = vperm.xlu0 %1963, %v1798
        %v1965 = vpop.permute.xlu0 %1964
        %1968 = vset.pattern.permute.xlu0 0
        %1969 = vperm.xlu0 %1968, %v1799
        %v1970 = vpop.permute.xlu0 %1969
        %1973 = vset.pattern.permute.xlu0 0
        %1974 = vperm.xlu0 %1973, %v1800
        %v1975 = vpop.permute.xlu0 %1974
        %1978 = vset.pattern.permute.xlu0 0
        %1979 = vperm.xlu0 %1978, %v1801
        %v1980 = vpop.permute.xlu0 %1979
        %v1982 = vmul.f32 %v1624, %v1805
        %v1983 = vmul.f32 %v1627, %v1810
        %v1984 = vmul.f32 %v1632, %v1815
        %v1985 = vmul.f32 %v1635, %v1820
        %v1986 = vmul.f32 %v1640, %v1825
        %v1987 = vmul.f32 %v1643, %v1830
        %v1988 = vmul.f32 %v1648, %v1835
        %v1989 = vmul.f32 %v1651, %v1840
        %v1990 = vmul.f32 %v1656, %v1845
        %v1991 = vmul.f32 %v1659, %v1850
        %v1992 = vmul.f32 %v1664, %v1855
        %v1993 = vmul.f32 %v1667, %v1860
        %v1994 = vmul.f32 %v1672, %v1865
        %v1995 = vmul.f32 %v1675, %v1870
        %v1996 = vmul.f32 %v1680, %v1875
        %v1997 = vmul.f32 %v1683, %v1880
        %v1998 = vmul.f32 %v1688, %v1885
        %v1999 = vmul.f32 %v1691, %v1890
        %v2000 = vmul.f32 %v1696, %v1895
        %v2001 = vmul.f32 %v1699, %v1900
        %v2002 = vmul.f32 %v1704, %v1905
        %v2003 = vmul.f32 %v1707, %v1910
        %v2004 = vmul.f32 %v1712, %v1915
        %v2005 = vmul.f32 %v1715, %v1920
        %v2006 = vmul.f32 %v1720, %v1925
        %v2007 = vmul.f32 %v1723, %v1930
        %v2008 = vmul.f32 %v1728, %v1935
        %v2009 = vmul.f32 %v1731, %v1940
        %v2010 = vmul.f32 %v1736, %v1945
        %v2011 = vmul.f32 %v1739, %v1950
        %v2012 = vmul.f32 %v1744, %v1955
        %v2013 = vmul.f32 %v1747, %v1960
        %v2014 = vmul.f32 %v1752, %v1965
        %v2015 = vmul.f32 %v1755, %v1970
        %v2016 = vmul.f32 %v1760, %v1975
        %v2017 = vmul.f32 %v1763, %v1980
        %v2018 = vsel %vm1069, %v1982, 0.0
        %v2019 = vsel %vm1069, %v1983, 0.0
        %v2020 = vadd.f32 %v2018, %v2019
        %v2021 = vsel %vm1069, %v1984, 0.0
        %v2022 = vadd.f32 %v2020, %v2021
        %v2023 = vsel %vm1069, %v1985, 0.0
        %v2024 = vadd.f32 %v2022, %v2023
        %v2025 = vsel %vm1069, %v1986, 0.0
        %v2026 = vadd.f32 %v2024, %v2025
        %v2027 = vsel %vm1069, %v1987, 0.0
        %v2028 = vadd.f32 %v2026, %v2027
        %v2029 = vsel %vm1069, %v1988, 0.0
        %v2030 = vadd.f32 %v2028, %v2029
        %v2031 = vsel %vm1069, %v1989, 0.0
        %v2032 = vadd.f32 %v2030, %v2031
        %v2033 = vsel %vm1069, %v1990, 0.0
        %v2034 = vadd.f32 %v2032, %v2033
        %v2035 = vsel %vm1069, %v1991, 0.0
        %v2036 = vadd.f32 %v2034, %v2035
        %v2037 = vsel %vm1069, %v1992, 0.0
        %v2038 = vadd.f32 %v2036, %v2037
        %v2039 = vsel %vm1069, %v1993, 0.0
        %v2040 = vadd.f32 %v2038, %v2039
        %v2041 = vsel %vm1069, %v1994, 0.0
        %v2042 = vadd.f32 %v2040, %v2041
        %v2043 = vsel %vm1069, %v1995, 0.0
        %v2044 = vadd.f32 %v2042, %v2043
        %v2045 = vsel %vm1069, %v1996, 0.0
        %v2046 = vadd.f32 %v2044, %v2045
        %v2047 = vsel %vm1069, %v1997, 0.0
        %v2048 = vadd.f32 %v2046, %v2047
        %v2049 = vsel %vm1069, %v1998, 0.0
        %v2050 = vadd.f32 %v2048, %v2049
        %v2051 = vsel %vm1069, %v1999, 0.0
        %v2052 = vadd.f32 %v2050, %v2051
        %v2053 = vsel %vm1069, %v2000, 0.0
        %v2054 = vadd.f32 %v2052, %v2053
        %v2055 = vsel %vm1069, %v2001, 0.0
        %v2056 = vadd.f32 %v2054, %v2055
        %v2057 = vsel %vm1069, %v2002, 0.0
        %v2058 = vadd.f32 %v2056, %v2057
        %v2059 = vsel %vm1069, %v2003, 0.0
        %v2060 = vadd.f32 %v2058, %v2059
        %v2061 = vsel %vm1069, %v2004, 0.0
        %v2062 = vadd.f32 %v2060, %v2061
        %v2063 = vsel %vm1069, %v2005, 0.0
        %v2064 = vadd.f32 %v2062, %v2063
        %v2065 = vsel %vm1069, %v2006, 0.0
        %v2066 = vadd.f32 %v2064, %v2065
        %v2067 = vsel %vm1069, %v2007, 0.0
        %v2068 = vadd.f32 %v2066, %v2067
        %v2069 = vsel %vm1069, %v2008, 0.0
        %v2070 = vadd.f32 %v2068, %v2069
        %v2071 = vsel %vm1069, %v2009, 0.0
        %v2072 = vadd.f32 %v2070, %v2071
        %v2073 = vsel %vm1069, %v2010, 0.0
        %v2074 = vadd.f32 %v2072, %v2073
        %v2075 = vsel %vm1069, %v2011, 0.0
        %v2076 = vadd.f32 %v2074, %v2075
        %v2077 = vsel %vm1069, %v2012, 0.0
        %v2078 = vadd.f32 %v2076, %v2077
        %v2079 = vsel %vm1069, %v2013, 0.0
        %v2080 = vadd.f32 %v2078, %v2079
        %v2081 = vsel %vm1069, %v2014, 0.0
        %v2082 = vadd.f32 %v2080, %v2081
        %v2083 = vsel %vm1069, %v2015, 0.0
        %v2084 = vadd.f32 %v2082, %v2083
        %v2085 = vsel %vm1069, %v2016, 0.0
        %v2086 = vadd.f32 %v2084, %v2085
        %v2087 = vsel %vm1069, %v2017, 0.0
        %v2088 = vadd.f32 %v2086, %v2087
        %v2089 = vrot.slane %v2088, 4
        %v2090 = vadd.f32 %v2088, %v2089
        %v2091 = vrot.slane %v2090, 2
        %v2092 = vadd.f32 %v2090, %v2091
        %v2093 = vrot.slane %v2092, 1
        %v2094 = vadd.f32 %v2092, %v2093
        %v2095 = vmul.f32 %v1982, %v1982
        %v2096 = vmul.f32 %v1983, %v1983
        %v2097 = vmul.f32 %v1984, %v1984
        %v2098 = vmul.f32 %v1985, %v1985
        %v2099 = vmul.f32 %v1986, %v1986
        %v2100 = vmul.f32 %v1987, %v1987
        %v2101 = vmul.f32 %v1988, %v1988
        %v2102 = vmul.f32 %v1989, %v1989
        %v2103 = vmul.f32 %v1990, %v1990
        %v2104 = vmul.f32 %v1991, %v1991
        %v2105 = vmul.f32 %v1992, %v1992
        %v2106 = vmul.f32 %v1993, %v1993
        %v2107 = vmul.f32 %v1994, %v1994
        %v2108 = vmul.f32 %v1995, %v1995
        %v2109 = vmul.f32 %v1996, %v1996
        %v2110 = vmul.f32 %v1997, %v1997
        %v2111 = vmul.f32 %v1998, %v1998
        %v2112 = vmul.f32 %v1999, %v1999
        %v2113 = vmul.f32 %v2000, %v2000
        %v2114 = vmul.f32 %v2001, %v2001
        %v2115 = vmul.f32 %v2002, %v2002
        %v2116 = vmul.f32 %v2003, %v2003
        %v2117 = vmul.f32 %v2004, %v2004
        %v2118 = vmul.f32 %v2005, %v2005
        %v2119 = vmul.f32 %v2006, %v2006
        %v2120 = vmul.f32 %v2007, %v2007
        %v2121 = vmul.f32 %v2008, %v2008
        %v2122 = vmul.f32 %v2009, %v2009
        %v2123 = vmul.f32 %v2010, %v2010
        %v2124 = vmul.f32 %v2011, %v2011
        %v2125 = vmul.f32 %v2012, %v2012
        %v2126 = vmul.f32 %v2013, %v2013
        %v2127 = vmul.f32 %v2014, %v2014
        %v2128 = vmul.f32 %v2015, %v2015
        %v2129 = vmul.f32 %v2016, %v2016
        %v2130 = vmul.f32 %v2017, %v2017
        %v2131 = vsel %vm1069, %v2095, 0.0
        %v2132 = vsel %vm1069, %v2096, 0.0
        %v2133 = vadd.f32 %v2131, %v2132
        %v2134 = vsel %vm1069, %v2097, 0.0
        %v2135 = vadd.f32 %v2133, %v2134
        %v2136 = vsel %vm1069, %v2098, 0.0
        %v2137 = vadd.f32 %v2135, %v2136
        %v2138 = vsel %vm1069, %v2099, 0.0
        %v2139 = vadd.f32 %v2137, %v2138
        %v2140 = vsel %vm1069, %v2100, 0.0
        %v2141 = vadd.f32 %v2139, %v2140
        %v2142 = vsel %vm1069, %v2101, 0.0
        %v2143 = vadd.f32 %v2141, %v2142
        %v2144 = vsel %vm1069, %v2102, 0.0
        %v2145 = vadd.f32 %v2143, %v2144
        %v2146 = vsel %vm1069, %v2103, 0.0
        %v2147 = vadd.f32 %v2145, %v2146
        %v2148 = vsel %vm1069, %v2104, 0.0
        %v2149 = vadd.f32 %v2147, %v2148
        %v2150 = vsel %vm1069, %v2105, 0.0
        %v2151 = vadd.f32 %v2149, %v2150
        %v2152 = vsel %vm1069, %v2106, 0.0
        %v2153 = vadd.f32 %v2151, %v2152
        %v2154 = vsel %vm1069, %v2107, 0.0
        %v2155 = vadd.f32 %v2153, %v2154
        %v2156 = vsel %vm1069, %v2108, 0.0
        %v2157 = vadd.f32 %v2155, %v2156
        %v2158 = vsel %vm1069, %v2109, 0.0
        %v2159 = vadd.f32 %v2157, %v2158
        %v2160 = vsel %vm1069, %v2110, 0.0
        %v2161 = vadd.f32 %v2159, %v2160
        %v2162 = vsel %vm1069, %v2111, 0.0
        %v2163 = vadd.f32 %v2161, %v2162
        %v2164 = vsel %vm1069, %v2112, 0.0
        %v2165 = vadd.f32 %v2163, %v2164
        %v2166 = vsel %vm1069, %v2113, 0.0
        %v2167 = vadd.f32 %v2165, %v2166
        %v2168 = vsel %vm1069, %v2114, 0.0
        %v2169 = vadd.f32 %v2167, %v2168
        %v2170 = vsel %vm1069, %v2115, 0.0
        %v2171 = vadd.f32 %v2169, %v2170
        %v2172 = vsel %vm1069, %v2116, 0.0
        %v2173 = vadd.f32 %v2171, %v2172
        %v2174 = vsel %vm1069, %v2117, 0.0
        %v2175 = vadd.f32 %v2173, %v2174
        %v2176 = vsel %vm1069, %v2118, 0.0
        %v2177 = vadd.f32 %v2175, %v2176
        %v2178 = vsel %vm1069, %v2119, 0.0
        %v2179 = vadd.f32 %v2177, %v2178
        %v2180 = vsel %vm1069, %v2120, 0.0
        %v2181 = vadd.f32 %v2179, %v2180
        %v2182 = vsel %vm1069, %v2121, 0.0
        %v2183 = vadd.f32 %v2181, %v2182
        %v2184 = vsel %vm1069, %v2122, 0.0
        %v2185 = vadd.f32 %v2183, %v2184
        %v2186 = vsel %vm1069, %v2123, 0.0
        %v2187 = vadd.f32 %v2185, %v2186
        %v2188 = vsel %vm1069, %v2124, 0.0
        %v2189 = vadd.f32 %v2187, %v2188
        %v2190 = vsel %vm1069, %v2125, 0.0
        %v2191 = vadd.f32 %v2189, %v2190
        %v2192 = vsel %vm1069, %v2126, 0.0
        %v2193 = vadd.f32 %v2191, %v2192
        %v2194 = vsel %vm1069, %v2127, 0.0
        %v2195 = vadd.f32 %v2193, %v2194
        %v2196 = vsel %vm1069, %v2128, 0.0
        %v2197 = vadd.f32 %v2195, %v2196
        %v2198 = vsel %vm1069, %v2129, 0.0
        %v2199 = vadd.f32 %v2197, %v2198
        %v2200 = vsel %vm1069, %v2130, 0.0
        %v2201 = vadd.f32 %v2199, %v2200
        %v2202 = vrot.slane %v2201, 4
        %v2203 = vadd.f32 %v2201, %v2202
        %v2204 = vrot.slane %v2203, 2
        %v2205 = vadd.f32 %v2203, %v2204
        %v2206 = vrot.slane %v2205, 1
        %v2207 = vadd.f32 %v2205, %v2206
        %vm2208 = vcmask 1040384
        %v2209 = vsel %vm2208, %v2094, %v2207
        %vm2210 = vcmask 123904
        %2211 = vst.msk [vmem:[%s198] sm:$0x3] %vm2210, %v2209
        %2212 = vst.msk [vmem:[%s208] sm:$0xff] %vm1069, 0.0
        %2213 = vst.msk [vmem:[%s208 + $0x8] sm:$0xff] %vm1069, 0.0
        %2214 = vst.msk [vmem:[%s208 + $0x10] sm:$0xff] %vm1069, 0.0
        %2215 = vst.msk [vmem:[%s208 + $0x18] sm:$0x3] %vm2210, 0.0
        %2216 = vst.msk [vmem:[%s208 + $0x1a] sm:$0xff] %vm1069, %v1982
        %2217 = vst.msk [vmem:[%s208 + $0x22] sm:$0xff] %vm1069, %v1983
        %2218 = vst.msk [vmem:[%s208 + $0x2a] sm:$0xff] %vm1069, %v1984
        %2219 = vst.msk [vmem:[%s208 + $0x32] sm:$0xff] %vm1069, %v1985
        %2220 = vst.msk [vmem:[%s208 + $0x3a] sm:$0xff] %vm1069, %v1986
        %2221 = vst.msk [vmem:[%s208 + $0x42] sm:$0xff] %vm1069, %v1987
        %2222 = vst.msk [vmem:[%s208 + $0x4a] sm:$0xff] %vm1069, %v1988
        %2223 = vst.msk [vmem:[%s208 + $0x52] sm:$0xff] %vm1069, %v1989
        %2224 = vst.msk [vmem:[%s208 + $0x5a] sm:$0xff] %vm1069, %v1990
        %2225 = vst.msk [vmem:[%s208 + $0x62] sm:$0xff] %vm1069, %v1991
        %2226 = vst.msk [vmem:[%s208 + $0x6a] sm:$0xff] %vm1069, %v1992
        %2227 = vst.msk [vmem:[%s208 + $0x72] sm:$0xff] %vm1069, %v1993
        %2228 = vst.msk [vmem:[%s208 + $0x7a] sm:$0xff] %vm1069, %v1994
        %2229 = vst.msk [vmem:[%s208 + $0x82] sm:$0xff] %vm1069, %v1995
        %2230 = vst.msk [vmem:[%s208 + $0x8a] sm:$0xff] %vm1069, %v1996
        %2231 = vst.msk [vmem:[%s208 + $0x92] sm:$0xff] %vm1069, %v1997
        %2232 = vst.msk [vmem:[%s208 + $0x9a] sm:$0xff] %vm1069, %v1998
        %2233 = vst.msk [vmem:[%s208 + $0xa2] sm:$0xff] %vm1069, %v1999
        %2234 = vst.msk [vmem:[%s208 + $0xaa] sm:$0xff] %vm1069, %v2000
        %2235 = vst.msk [vmem:[%s208 + $0xb2] sm:$0xff] %vm1069, %v2001
        %2236 = vst.msk [vmem:[%s208 + $0xba] sm:$0xff] %vm1069, %v2002
        %2237 = vst.msk [vmem:[%s208 + $0xc2] sm:$0xff] %vm1069, %v2003
        %2238 = vst.msk [vmem:[%s208 + $0xca] sm:$0xff] %vm1069, %v2004
        %2239 = vst.msk [vmem:[%s208 + $0xd2] sm:$0xff] %vm1069, %v2005
        %2240 = vst.msk [vmem:[%s208 + $0xda] sm:$0xff] %vm1069, %v2006
        %2241 = vst.msk [vmem:[%s208 + $0xe2] sm:$0xff] %vm1069, %v2007
        %2242 = vst.msk [vmem:[%s208 + $0xea] sm:$0xff] %vm1069, %v2008
        %2243 = vst.msk [vmem:[%s208 + $0xf2] sm:$0xff] %vm1069, %v2009
        %2244 = vst.msk [vmem:[%s208 + $0xfa] sm:$0xff] %vm1069, %v2010
        %2245 = vst.msk [vmem:[%s208 + $0x102] sm:$0xff] %vm1069, %v2011
        %2246 = vst.msk [vmem:[%s208 + $0x10a] sm:$0xff] %vm1069, %v2012
        %2247 = vst.msk [vmem:[%s208 + $0x112] sm:$0xff] %vm1069, %v2013
        %2248 = vst.msk [vmem:[%s208 + $0x11a] sm:$0xff] %vm1069, %v2014
        %2249 = vst.msk [vmem:[%s208 + $0x122] sm:$0xff] %vm1069, %v2015
        %2250 = vst.msk [vmem:[%s208 + $0x12a] sm:$0xff] %vm1069, %v2016
        %2251 = vst.msk [vmem:[%s208 + $0x132] sm:$0xff] %vm1069, %v2017
        %2252 = vst.msk [vmem:[%s208 + $0x13a] sm:$0xff] %vm1069, 0.0
        %2253 = vst.msk [vmem:[%s208 + $0x142] sm:$0xff] %vm1069, 0.0
        %2254 = vst.msk [vmem:[%s208 + $0x14a] sm:$0xff] %vm1069, 0.0
        %2255 = vst.msk [vmem:[%s208 + $0x152] sm:$0x3] %vm2210, 0.0
        %p2256 = scmp.lt.s32.totalorder %s19, 1
        %s2257 = scalar_select %p2256, %s19, 1
        %s2258 = smul.addr %s2257, 43
        %s2259 = smul.addr %s2258, 8
        %s2260 = scalar_lea.vmem %s3, %s2259
        %s2261 = sand.u32 %s121, 1
        %s2262 = scalar_lea.sflag [#allocation3], %s2261
        %s2263 = sand.u32 %s121, 1
        %s2264 = smul.addr %s2263, 2
        %s2265 = scalar_lea.vmem [#allocation2], %s2264
        // Predicated region
        $region33: #{tpu_custom_call.1} parent=31 // pred_check
          %p2266 = pneg %p105
        $region34: #{tpu_custom_call.1} parent=31 // pred_check_branch
          %2268 = sbr.rel (%p2266) target = $region36
        $region35: #{tpu_custom_call.1} parent=31 // pred_region
          _
        $region36: #{tpu_custom_call.1} parent=31 // pred_fallthru
          _
        // Predicated region
        $region37: #{tpu_custom_call.1} parent=31 // pred_check
          %p2269 = pneg %p131
        $region38: #{tpu_custom_call.1} parent=31 // pred_check_branch
          %2271 = sbr.rel (%p2269) target = $region40
        $region39: #{tpu_custom_call.1} parent=31 // pred_region
          %s2273 = ssub.s32 32, 32
          %2274 = vsyncadd %s2262, %s2273
          %s2275 = smul.addr %s19, 32
          %s2276 = scalar_lea.hbm %s4, %s2275
          %s2278 = sshll.u32 %s2265, 4
          %s2279 = int_to_ptr.vmem [resolvable:$true] %s2278
          %2281 = dma.vmem_to_hbm [thread:$0]  %s2279, 32, %s2276, %s2262
        $region40: #{tpu_custom_call.1} parent=31 // pred_fallthru
          _
      $region32: #{tpu_custom_call.1} parent=5 // pred_fallthru
        _
      %p2282 = scmp.le.s32.totalorder 2, %s14
      // Predicated region
      $region41: #{tpu_custom_call.1} parent=5 // pred_check
        %p2283 = pneg %p2282
      $region42: #{tpu_custom_call.1} parent=5 // pred_check_branch
        %2285 = sbr.rel (%p2283) target = $region44
      $region43: #{tpu_custom_call.1} parent=5 // pred_region
        %s2286 = ssub.s32 %s14, 2
        // Predicated region
        $region45: #{tpu_custom_call.1} parent=43 // pred_check
          %p2287 = pneg %p111
        $region46: #{tpu_custom_call.1} parent=43 // pred_check_branch
          %2289 = sbr.rel (%p2287) target = $region48
        $region47: #{tpu_custom_call.1} parent=43 // pred_region
          %p2290 = scmp.lt.s32.totalorder %s20, 1
          %s2291 = scalar_select %p2290, %s20, 1
          %s2292 = smul.addr %s2291, 43
          %s2293 = smul.addr %s2292, 8
          %s2294 = scalar_lea.vmem %s3, %s2293
        $region48: #{tpu_custom_call.1} parent=43 // pred_fallthru
          _
        // Predicated region
        $region49: #{tpu_custom_call.1} parent=43 // pred_check
          %p2295 = pneg %p137
        $region50: #{tpu_custom_call.1} parent=43 // pred_check_branch
          %2297 = sbr.rel (%p2295) target = $region52
        $region51: #{tpu_custom_call.1} parent=43 // pred_region
          %s2298 = sand.u32 %s122, 1
          %s2299 = scalar_lea.sflag [#allocation3], %s2298
          %s2300 = sand.u32 %s122, 1
          %s2301 = smul.addr %s2300, 2
          %s2302 = scalar_lea.vmem [#allocation2], %s2301
          %2303 = dma.done %s2299, 32
        $region52: #{tpu_custom_call.1} parent=43 // pred_fallthru
          _
      $region44: #{tpu_custom_call.1} parent=5 // pred_fallthru
        _
    $region6: #{tpu_custom_call.1} parent=1 // loop_footer
      %s18 = sadd.s32 1, %s14
    $region7: #{tpu_custom_call.1} parent=1 // loop_footer_branch
      %13 = sbr.rel target = $region3
    $region8: #{tpu_custom_call.1} parent=1 // loop_exit
      _
    %2304 = vsyncpa [#allocation3], 1
    %s2305 = scalar_lea.sflag [#allocation3], 1
    %2306 = vsyncpa %s2305, 1

</llo_original>
